<compile_context>
chip_gen: v7x
topology: tpu7x:2x2x1
jax: 0.10.0
libtpu: 0.0.40
codegen_flags: <defaults>
</compile_context>

<pallas_src>
import functools

import jax
import jax.numpy as jnp
import numpy as np
from jax.experimental import pallas as pl
from jax.experimental.pallas import tpu as pltpu


def _make_kernel(cin, K1, K2, K3, L1, L2, L3, C, hidden, e_dims):
    ck1 = cin * K1
    o2 = ck1               # start of conv2 weights in the packed slab
    o3 = o2 + K2 * C       # start of conv3 weights
    o4 = o3 + K3 * C       # end of slab
    f32 = jnp.float32

    def kernel(p1_ref, wconv_ref, wfc_ref, wfc2_ref, wfc3_ref, b_ref, o_ref):
        bt = p1_ref.shape[0]

        # ---- conv1 (kernel 8, stride 2): im2col already done in the wrapper ----
        p1 = p1_ref[...].reshape(bt * L1, ck1)                      # (BT*L1, cin*K1)
        h = jnp.dot(p1, wconv_ref[0:o2, :], preferred_element_type=f32)
        h = jnp.maximum(h + b_ref[0:1, 0:C], 0.0)                   # (BT*L1, C)
        h = h.reshape(bt, L1, C)

        # ---- conv2 (kernel 5): widen K by concatenating taps along channels ----
        # Per-sample (3-D) shifted slices, so windows never cross batch boundaries.
        p2 = jnp.concatenate([h[:, k:k + L2, :] for k in range(K2)], axis=2)
        p2 = p2.reshape(bt * L2, K2 * C)                            # (BT*L2, 320)
        h = jnp.dot(p2, wconv_ref[o2:o3, :], preferred_element_type=f32)
        h = jnp.maximum(h + b_ref[1:2, 0:C], 0.0)
        h = h.reshape(bt, L2, C)

        # ---- conv3 (kernel 5) ----
        p3 = jnp.concatenate([h[:, k:k + L3, :] for k in range(K3)], axis=2)
        p3 = p3.reshape(bt * L3, K3 * C)                            # (BT*L3, 320)
        h = jnp.dot(p3, wconv_ref[o3:o4, :], preferred_element_type=f32)
        h = jnp.maximum(h + b_ref[2:3, 0:C], 0.0)
        h = h.reshape(bt, L3, C)

        # ---- fc: single (BT, L3*C) @ (L3*C, hidden) matmul.
        # Lane-concat over length positions gives per-sample (l, c) flatten order,
        # which matches the pre-permuted fc weight (PyTorch flattens as c*L3 + l).
        hf = jnp.concatenate([h[:, l, :] for l in range(L3)], axis=1)   # (BT, L3*C)
        z = jnp.dot(hf, wfc_ref[...], preferred_element_type=f32)
        z = jnp.maximum(z + b_ref[3:4, 0:hidden], 0.0)              # (BT, 32)

        # ---- fc2 (ReLU) + fc3 (linear), batched over BT ----
        z = jnp.dot(z, wfc2_ref[...], preferred_element_type=f32)
        z = jnp.maximum(z + b_ref[4:5, 0:hidden], 0.0)
        out = jnp.dot(z, wfc3_ref[...], preferred_element_type=f32) + b_ref[5:6, 0:e_dims]
        o_ref[...] = out.astype(o_ref.dtype)                        # (BT, e_dims)

    return kernel


def adaptation_forward(x, params, *, batch_tile=128):
    """x: (B, C_in, L) float32 in PyTorch NCL layout (same as Conv1d input)."""
    B, cin, L = x.shape
    w1, b1 = params["conv1_w"], params["conv1_b"]
    w2, b2 = params["conv2_w"], params["conv2_b"]
    w3, b3 = params["conv3_w"], params["conv3_b"]
    wfc, bfc = params["fc_w"], params["fc_b"]
    wfc2, bfc2 = params["fc2_w"], params["fc2_b"]
    wfc3, bfc3 = params["fc3_w"], params["fc3_b"]

    C, _, K1 = w1.shape
    K2, K3, stride1 = w2.shape[2], w3.shape[2], 2
    L1 = (L - K1) // stride1 + 1
    L2 = L1 - (K2 - 1)
    L3 = L2 - (K3 - 1)
    hidden = wfc.shape[0]
    e_dims = wfc3.shape[0]

    # ---- choose a batch tile; keep the output block sublane-friendly ----
    if B <= batch_tile:
        BT = B
    else:
        BT = max(8, (batch_tile // 8) * 8)
    B_pad = ((B + BT - 1) // BT) * BT
    if B_pad != B:
        x = jnp.concatenate(
            [x, jnp.zeros((B_pad - B, cin, L), x.dtype)], axis=0)

    # ---- glue: im2col for the strided conv1 (tiny; runs once in XLA) ----
    idx = jnp.arange(L1)[:, None] * stride1 + jnp.arange(K1)[None, :]   # (L1, K1)
    p1 = x[:, :, idx]                                                   # (B_pad, cin, L1, K1)
    p1 = jnp.transpose(p1, (0, 2, 1, 3)).reshape(B_pad, L1, cin * K1)

    # ---- glue: pack weights/biases so every layer is a plain 2-D matmul ----
    w1_m = w1.reshape(C, cin * K1).T                                  # (cin*K1, C)
    w2_f = jnp.transpose(w2, (2, 1, 0)).reshape(K2 * C, C)            # rows = k*C + i
    w3_f = jnp.transpose(w3, (2, 1, 0)).reshape(K3 * C, C)
    wconv = jnp.concatenate([w1_m, w2_f, w3_f], axis=0)               # (cin*K1 + (K2+K3)*C, C)
    # torch flatten index f = c*L3 + l ; kernel flatten index l*C + c
    wfc_f = wfc.reshape(hidden, C, L3).transpose(2, 1, 0).reshape(L3 * C, hidden)
    wfc2_t = wfc2.T                                                   # (hidden, hidden)
    wfc3_t = wfc3.T                                                   # (hidden, e_dims)

    bw = max(C, hidden, e_dims)
    bias_pack = jnp.zeros((6, bw), jnp.float32)
    bias_pack = bias_pack.at[0, :C].set(b1)
    bias_pack = bias_pack.at[1, :C].set(b2)
    bias_pack = bias_pack.at[2, :C].set(b3)
    bias_pack = bias_pack.at[3, :hidden].set(bfc)
    bias_pack = bias_pack.at[4, :hidden].set(bfc2)
    bias_pack = bias_pack.at[5, :e_dims].set(bfc3)

    kernel = _make_kernel(cin, K1, K2, K3, L1, L2, L3, C, hidden, e_dims)

    def rep(arr):
        n = arr.ndim
        return pl.BlockSpec(arr.shape, lambda b, n=n: (0,) * n)

    grid = (B_pad // BT,)
    in_specs = [
        pl.BlockSpec((BT, L1, cin * K1), lambda b: (b, 0, 0)),
        rep(wconv), rep(wfc_f), rep(wfc2_t), rep(wfc3_t), rep(bias_pack),
    ]
    out_spec = pl.BlockSpec((BT, e_dims), lambda b: (b, 0))

    out = pl.pallas_call(
        kernel,
        out_shape=jax.ShapeDtypeStruct((B_pad, e_dims), jnp.float32),
        grid=grid,
        in_specs=in_specs,
        out_specs=out_spec,
        compiler_params=pltpu.CompilerParams(
            dimension_semantics=("parallel",)),
    )(p1, wconv, wfc_f, wfc2_t, wfc3_t, bias_pack)
    return out[:B]


adaptation_forward_jit = jax.jit(adaptation_forward, static_argnames=("batch_tile",))


def reference_forward(x, params):
    """Pure-JAX mirror of the PyTorch forward (for verification only)."""
    P = jax.lax.Precision.HIGHEST

    def conv1d(h, w, b, stride):
        out = jax.lax.conv_general_dilated(
            h, w, window_strides=(stride,), padding="VALID",
            dimension_numbers=("NCH", "OIH", "NCH"), precision=P)
        return out + b[None, :, None]

    h = jax.nn.relu(conv1d(x, params["conv1_w"], params["conv1_b"], 2))
    h = jax.nn.relu(conv1d(h, params["conv2_w"], params["conv2_b"], 1))
    h = jax.nn.relu(conv1d(h, params["conv3_w"], params["conv3_b"], 1))
    h = h.reshape(h.shape[0], -1)                                  # channel-major flatten
    h = jax.nn.relu(jnp.dot(h, params["fc_w"].T, precision=P) + params["fc_b"])
    h = jax.nn.relu(jnp.dot(h, params["fc2_w"].T, precision=P) + params["fc2_b"])
    return jnp.dot(h, params["fc3_w"].T, precision=P) + params["fc3_b"]


def init_params(key, input_dims, e_dims, channels=64):
    ks = jax.random.split(key, 12)

    def w(k, shape, fan_in):
        return jax.random.normal(k, shape, jnp.float32) / np.sqrt(fan_in)

    return {
        "conv1_w": w(ks[0], (channels, input_dims, 8), input_dims * 8),
        "conv1_b": w(ks[1], (channels,), input_dims * 8),
        "conv2_w": w(ks[2], (channels, channels, 5), channels * 5),
        "conv2_b": w(ks[3], (channels,), channels * 5),
        "conv3_w": w(ks[4], (channels, channels, 5), channels * 5),
        "conv3_b": w(ks[5], (channels,), channels * 5),
        "fc_w":    w(ks[6], (32, 14 * channels), 14 * channels),
        "fc_b":    w(ks[7], (32,), 14 * channels),
        "fc2_w":   w(ks[8], (32, 32), 32),
        "fc2_b":   w(ks[9], (32,), 32),
        "fc3_w":   w(ks[10], (e_dims, 32), 32),
        "fc3_b":   w(ks[11], (e_dims,), 32),
    }


if __name__ == "__main__":
    key = jax.random.PRNGKey(0)
    k_x, k_p, k_x2 = jax.random.split(key, 3)
    # L = 50 is the sequence length implied by the module (conv stack -> L3 = 14).
    B, input_dims, L, e_dims = 2, 4, 50, 8
    x = jax.random.normal(k_x, (B, input_dims, L), jnp.float32)
    params = init_params(k_p, input_dims, e_dims, channels=64)  # complex=True

    out = jax.block_until_ready(adaptation_forward_jit(x, params))
    ref = reference_forward(x, params)
    np.testing.assert_allclose(np.asarray(out), np.asarray(ref),
                               rtol=5e-3, atol=5e-3)

    # Also exercise the batch-tiled multi-step path (grid > 1, padded batch).
    B2 = 10
    x2 = jax.random.normal(k_x2, (B2, input_dims, L), jnp.float32)
    out2 = jax.block_until_ready(adaptation_forward_jit(x2, params, batch_tile=8))
    ref2 = reference_forward(x2, params)
    np.testing.assert_allclose(np.asarray(out2), np.asarray(ref2),
                               rtol=5e-3, atol=5e-3)

    print("KERNEL_OK")
</pallas_src>

<mosaic_0001>
module attributes {stable_mosaic.version = 11 : i64} {
  func.func @kernel(%arg0: i32, %arg1: memref<2x22x32xf32, #tpu.memory_space<vmem>>, %arg2: memref<672x64xf32, #tpu.memory_space<vmem>>, %arg3: memref<896x32xf32, #tpu.memory_space<vmem>>, %arg4: memref<32x32xf32, #tpu.memory_space<vmem>>, %arg5: memref<32x8xf32, #tpu.memory_space<vmem>>, %arg6: memref<6x64xf32, #tpu.memory_space<vmem>>, %arg7: memref<2x8xf32, #tpu.memory_space<vmem>>) attributes {dimension_semantics = [#tpu.dimension_semantics<parallel>], iteration_bounds = array<i64: 1>, scalar_prefetch = 0 : i64, scratch_operands = 0 : i64, tpu.core_type = #tpu.core_type<tc>, window_params = [{transform_indices = @transform_0, window_bounds = array<i64: 2, 22, 32>}, {pipeline_mode = #tpu.pipeline_mode<synchronous>, transform_indices = @transform_1, window_bounds = array<i64: 672, 64>}, {pipeline_mode = #tpu.pipeline_mode<synchronous>, transform_indices = @transform_2, window_bounds = array<i64: 896, 32>}, {pipeline_mode = #tpu.pipeline_mode<synchronous>, transform_indices = @transform_3, window_bounds = array<i64: 32, 32>}, {pipeline_mode = #tpu.pipeline_mode<synchronous>, transform_indices = @transform_4, window_bounds = array<i64: 32, 8>}, {pipeline_mode = #tpu.pipeline_mode<synchronous>, transform_indices = @transform_5, window_bounds = array<i64: 6, 64>}, {transform_indices = @transform_6, window_bounds = array<i64: 2, 8>}]} {
    %c0 = arith.constant 0 : index
    %c0_0 = arith.constant 0 : index
    %c0_1 = arith.constant 0 : index
    %0 = vector.load %arg1[%c0, %c0_0, %c0_1] : memref<2x22x32xf32, #tpu.memory_space<vmem>>, vector<2x22x32xf32>
    %1 = vector.shape_cast %0 : vector<2x22x32xf32> to vector<44x32xf32>
    %c0_2 = arith.constant 0 : index
    %c0_3 = arith.constant 0 : index
    %2 = vector.load %arg2[%c0_2, %c0_3] : memref<672x64xf32, #tpu.memory_space<vmem>>, vector<32x64xf32>
    %cst = arith.constant dense<0.000000e+00> : vector<44x64xf32>
    %3 = tpu.matmul %1, %2, %cst {dimension_numbers = #tpu.dot_dimension_numbers<[1], [0], [0], [1], [0, 0, 1, 1], [], []>} : vector<44x32xf32>, vector<32x64xf32>, vector<44x64xf32> -> vector<44x64xf32>
    %c0_4 = arith.constant 0 : index
    %c0_5 = arith.constant 0 : index
    %4 = vector.load %arg6[%c0_4, %c0_5] : memref<6x64xf32, #tpu.memory_space<vmem>>, vector<1x64xf32>
    %5 = vector.broadcast %4 : vector<1x64xf32> to vector<44x64xf32>
    %6 = arith.addf %3, %5 : vector<44x64xf32>
    %cst_6 = arith.constant 0.000000e+00 : f32
    %7 = vector.broadcast %cst_6 : f32 to vector<44x64xf32>
    %8 = arith.maximumf %6, %7 : vector<44x64xf32>
    %9 = vector.shape_cast %8 : vector<44x64xf32> to vector<2x22x64xf32>
    %10 = vector.extract_strided_slice %9 {offsets = [0, 0, 0], sizes = [2, 18, 64], strides = [1, 1, 1]} : vector<2x22x64xf32> to vector<2x18x64xf32>
    %11 = vector.extract_strided_slice %9 {offsets = [0, 1, 0], sizes = [2, 18, 64], strides = [1, 1, 1]} : vector<2x22x64xf32> to vector<2x18x64xf32>
    %12 = vector.extract_strided_slice %9 {offsets = [0, 2, 0], sizes = [2, 18, 64], strides = [1, 1, 1]} : vector<2x22x64xf32> to vector<2x18x64xf32>
    %13 = vector.extract_strided_slice %9 {offsets = [0, 3, 0], sizes = [2, 18, 64], strides = [1, 1, 1]} : vector<2x22x64xf32> to vector<2x18x64xf32>
    %14 = vector.extract_strided_slice %9 {offsets = [0, 4, 0], sizes = [2, 18, 64], strides = [1, 1, 1]} : vector<2x22x64xf32> to vector<2x18x64xf32>
    %15 = tpu.concatenate %10, %11, %12, %13, %14 in 2 : vector<2x18x64xf32>, vector<2x18x64xf32>, vector<2x18x64xf32>, vector<2x18x64xf32>, vector<2x18x64xf32> -> vector<2x18x320xf32>
    %16 = vector.shape_cast %15 : vector<2x18x320xf32> to vector<36x320xf32>
    %c32 = arith.constant 32 : index
    %c0_7 = arith.constant 0 : index
    %17 = vector.load %arg2[%c32, %c0_7] : memref<672x64xf32, #tpu.memory_space<vmem>>, vector<320x64xf32>
    %cst_8 = arith.constant dense<0.000000e+00> : vector<36x64xf32>
    %18 = tpu.matmul %16, %17, %cst_8 {dimension_numbers = #tpu.dot_dimension_numbers<[1], [0], [0], [1], [0, 0, 1, 1], [], []>} : vector<36x320xf32>, vector<320x64xf32>, vector<36x64xf32> -> vector<36x64xf32>
    %c1 = arith.constant 1 : index
    %c0_9 = arith.constant 0 : index
    %19 = vector.load %arg6[%c1, %c0_9] : memref<6x64xf32, #tpu.memory_space<vmem>>, vector<1x64xf32>
    %20 = vector.broadcast %19 : vector<1x64xf32> to vector<36x64xf32>
    %21 = arith.addf %18, %20 : vector<36x64xf32>
    %cst_10 = arith.constant 0.000000e+00 : f32
    %22 = vector.broadcast %cst_10 : f32 to vector<36x64xf32>
    %23 = arith.maximumf %21, %22 : vector<36x64xf32>
    %24 = vector.shape_cast %23 : vector<36x64xf32> to vector<2x18x64xf32>
    %25 = vector.extract_strided_slice %24 {offsets = [0, 0, 0], sizes = [2, 14, 64], strides = [1, 1, 1]} : vector<2x18x64xf32> to vector<2x14x64xf32>
    %26 = vector.extract_strided_slice %24 {offsets = [0, 1, 0], sizes = [2, 14, 64], strides = [1, 1, 1]} : vector<2x18x64xf32> to vector<2x14x64xf32>
    %27 = vector.extract_strided_slice %24 {offsets = [0, 2, 0], sizes = [2, 14, 64], strides = [1, 1, 1]} : vector<2x18x64xf32> to vector<2x14x64xf32>
    %28 = vector.extract_strided_slice %24 {offsets = [0, 3, 0], sizes = [2, 14, 64], strides = [1, 1, 1]} : vector<2x18x64xf32> to vector<2x14x64xf32>
    %29 = vector.extract_strided_slice %24 {offsets = [0, 4, 0], sizes = [2, 14, 64], strides = [1, 1, 1]} : vector<2x18x64xf32> to vector<2x14x64xf32>
    %30 = tpu.concatenate %25, %26, %27, %28, %29 in 2 : vector<2x14x64xf32>, vector<2x14x64xf32>, vector<2x14x64xf32>, vector<2x14x64xf32>, vector<2x14x64xf32> -> vector<2x14x320xf32>
    %31 = vector.shape_cast %30 : vector<2x14x320xf32> to vector<28x320xf32>
    %c352 = arith.constant 352 : index
    %c0_11 = arith.constant 0 : index
    %32 = vector.load %arg2[%c352, %c0_11] : memref<672x64xf32, #tpu.memory_space<vmem>>, vector<320x64xf32>
    %cst_12 = arith.constant dense<0.000000e+00> : vector<28x64xf32>
    %33 = tpu.matmul %31, %32, %cst_12 {dimension_numbers = #tpu.dot_dimension_numbers<[1], [0], [0], [1], [0, 0, 1, 1], [], []>} : vector<28x320xf32>, vector<320x64xf32>, vector<28x64xf32> -> vector<28x64xf32>
    %c2 = arith.constant 2 : index
    %c0_13 = arith.constant 0 : index
    %34 = vector.load %arg6[%c2, %c0_13] : memref<6x64xf32, #tpu.memory_space<vmem>>, vector<1x64xf32>
    %35 = vector.broadcast %34 : vector<1x64xf32> to vector<28x64xf32>
    %36 = arith.addf %33, %35 : vector<28x64xf32>
    %cst_14 = arith.constant 0.000000e+00 : f32
    %37 = vector.broadcast %cst_14 : f32 to vector<28x64xf32>
    %38 = arith.maximumf %36, %37 : vector<28x64xf32>
    %39 = vector.shape_cast %38 : vector<28x64xf32> to vector<2x14x64xf32>
    %40 = vector.extract_strided_slice %39 {offsets = [0, 0, 0], sizes = [2, 1, 64], strides = [1, 1, 1]} : vector<2x14x64xf32> to vector<2x1x64xf32>
    %41 = vector.shape_cast %40 : vector<2x1x64xf32> to vector<2x64xf32>
    %42 = vector.extract_strided_slice %39 {offsets = [0, 1, 0], sizes = [2, 1, 64], strides = [1, 1, 1]} : vector<2x14x64xf32> to vector<2x1x64xf32>
    %43 = vector.shape_cast %42 : vector<2x1x64xf32> to vector<2x64xf32>
    %44 = vector.extract_strided_slice %39 {offsets = [0, 2, 0], sizes = [2, 1, 64], strides = [1, 1, 1]} : vector<2x14x64xf32> to vector<2x1x64xf32>
    %45 = vector.shape_cast %44 : vector<2x1x64xf32> to vector<2x64xf32>
    %46 = vector.extract_strided_slice %39 {offsets = [0, 3, 0], sizes = [2, 1, 64], strides = [1, 1, 1]} : vector<2x14x64xf32> to vector<2x1x64xf32>
    %47 = vector.shape_cast %46 : vector<2x1x64xf32> to vector<2x64xf32>
    %48 = vector.extract_strided_slice %39 {offsets = [0, 4, 0], sizes = [2, 1, 64], strides = [1, 1, 1]} : vector<2x14x64xf32> to vector<2x1x64xf32>
    %49 = vector.shape_cast %48 : vector<2x1x64xf32> to vector<2x64xf32>
    %50 = vector.extract_strided_slice %39 {offsets = [0, 5, 0], sizes = [2, 1, 64], strides = [1, 1, 1]} : vector<2x14x64xf32> to vector<2x1x64xf32>
    %51 = vector.shape_cast %50 : vector<2x1x64xf32> to vector<2x64xf32>
    %52 = vector.extract_strided_slice %39 {offsets = [0, 6, 0], sizes = [2, 1, 64], strides = [1, 1, 1]} : vector<2x14x64xf32> to vector<2x1x64xf32>
    %53 = vector.shape_cast %52 : vector<2x1x64xf32> to vector<2x64xf32>
    %54 = vector.extract_strided_slice %39 {offsets = [0, 7, 0], sizes = [2, 1, 64], strides = [1, 1, 1]} : vector<2x14x64xf32> to vector<2x1x64xf32>
    %55 = vector.shape_cast %54 : vector<2x1x64xf32> to vector<2x64xf32>
    %56 = vector.extract_strided_slice %39 {offsets = [0, 8, 0], sizes = [2, 1, 64], strides = [1, 1, 1]} : vector<2x14x64xf32> to vector<2x1x64xf32>
    %57 = vector.shape_cast %56 : vector<2x1x64xf32> to vector<2x64xf32>
    %58 = vector.extract_strided_slice %39 {offsets = [0, 9, 0], sizes = [2, 1, 64], strides = [1, 1, 1]} : vector<2x14x64xf32> to vector<2x1x64xf32>
    %59 = vector.shape_cast %58 : vector<2x1x64xf32> to vector<2x64xf32>
    %60 = vector.extract_strided_slice %39 {offsets = [0, 10, 0], sizes = [2, 1, 64], strides = [1, 1, 1]} : vector<2x14x64xf32> to vector<2x1x64xf32>
    %61 = vector.shape_cast %60 : vector<2x1x64xf32> to vector<2x64xf32>
    %62 = vector.extract_strided_slice %39 {offsets = [0, 11, 0], sizes = [2, 1, 64], strides = [1, 1, 1]} : vector<2x14x64xf32> to vector<2x1x64xf32>
    %63 = vector.shape_cast %62 : vector<2x1x64xf32> to vector<2x64xf32>
    %64 = vector.extract_strided_slice %39 {offsets = [0, 12, 0], sizes = [2, 1, 64], strides = [1, 1, 1]} : vector<2x14x64xf32> to vector<2x1x64xf32>
    %65 = vector.shape_cast %64 : vector<2x1x64xf32> to vector<2x64xf32>
    %66 = vector.extract_strided_slice %39 {offsets = [0, 13, 0], sizes = [2, 1, 64], strides = [1, 1, 1]} : vector<2x14x64xf32> to vector<2x1x64xf32>
    %67 = vector.shape_cast %66 : vector<2x1x64xf32> to vector<2x64xf32>
    %68 = tpu.concatenate %41, %43, %45, %47, %49, %51, %53, %55, %57, %59, %61, %63, %65, %67 in 1 : vector<2x64xf32>, vector<2x64xf32>, vector<2x64xf32>, vector<2x64xf32>, vector<2x64xf32>, vector<2x64xf32>, vector<2x64xf32>, vector<2x64xf32>, vector<2x64xf32>, vector<2x64xf32>, vector<2x64xf32>, vector<2x64xf32>, vector<2x64xf32>, vector<2x64xf32> -> vector<2x896xf32>
    %c0_15 = arith.constant 0 : index
    %c0_16 = arith.constant 0 : index
    %69 = vector.load %arg3[%c0_15, %c0_16] : memref<896x32xf32, #tpu.memory_space<vmem>>, vector<896x32xf32>
    %cst_17 = arith.constant dense<0.000000e+00> : vector<2x32xf32>
    %70 = tpu.matmul %68, %69, %cst_17 {dimension_numbers = #tpu.dot_dimension_numbers<[1], [0], [0], [1], [0, 0, 1, 1], [], []>} : vector<2x896xf32>, vector<896x32xf32>, vector<2x32xf32> -> vector<2x32xf32>
    %c3 = arith.constant 3 : index
    %c0_18 = arith.constant 0 : index
    %71 = vector.load %arg6[%c3, %c0_18] : memref<6x64xf32, #tpu.memory_space<vmem>>, vector<1x32xf32>
    %72 = vector.broadcast %71 : vector<1x32xf32> to vector<2x32xf32>
    %73 = arith.addf %70, %72 : vector<2x32xf32>
    %cst_19 = arith.constant 0.000000e+00 : f32
    %74 = vector.broadcast %cst_19 : f32 to vector<2x32xf32>
    %75 = arith.maximumf %73, %74 : vector<2x32xf32>
    %c0_20 = arith.constant 0 : index
    %c0_21 = arith.constant 0 : index
    %76 = vector.load %arg4[%c0_20, %c0_21] : memref<32x32xf32, #tpu.memory_space<vmem>>, vector<32x32xf32>
    %cst_22 = arith.constant dense<0.000000e+00> : vector<2x32xf32>
    %77 = tpu.matmul %75, %76, %cst_22 {dimension_numbers = #tpu.dot_dimension_numbers<[1], [0], [0], [1], [0, 0, 1, 1], [], []>} : vector<2x32xf32>, vector<32x32xf32>, vector<2x32xf32> -> vector<2x32xf32>
    %c4 = arith.constant 4 : index
    %c0_23 = arith.constant 0 : index
    %78 = vector.load %arg6[%c4, %c0_23] : memref<6x64xf32, #tpu.memory_space<vmem>>, vector<1x32xf32>
    %79 = vector.broadcast %78 : vector<1x32xf32> to vector<2x32xf32>
    %80 = arith.addf %77, %79 : vector<2x32xf32>
    %cst_24 = arith.constant 0.000000e+00 : f32
    %81 = vector.broadcast %cst_24 : f32 to vector<2x32xf32>
    %82 = arith.maximumf %80, %81 : vector<2x32xf32>
    %c0_25 = arith.constant 0 : index
    %c0_26 = arith.constant 0 : index
    %83 = vector.load %arg5[%c0_25, %c0_26] : memref<32x8xf32, #tpu.memory_space<vmem>>, vector<32x8xf32>
    %cst_27 = arith.constant dense<0.000000e+00> : vector<2x8xf32>
    %84 = tpu.matmul %82, %83, %cst_27 {dimension_numbers = #tpu.dot_dimension_numbers<[1], [0], [0], [1], [0, 0, 1, 1], [], []>} : vector<2x32xf32>, vector<32x8xf32>, vector<2x8xf32> -> vector<2x8xf32>
    %c5 = arith.constant 5 : index
    %c0_28 = arith.constant 0 : index
    %85 = vector.load %arg6[%c5, %c0_28] : memref<6x64xf32, #tpu.memory_space<vmem>>, vector<1x8xf32>
    %86 = vector.broadcast %85 : vector<1x8xf32> to vector<2x8xf32>
    %87 = arith.addf %84, %86 : vector<2x8xf32>
    %c0_29 = arith.constant 0 : index
    %c0_30 = arith.constant 0 : index
    %88 = vector.load %arg7[%c0_29, %c0_30] : memref<2x8xf32, #tpu.memory_space<vmem>>, vector<2x8xf32>
    tpu.vector_store %arg7[%c0_29, %c0_30], %87 {strides = array<i32>} : memref<2x8xf32, #tpu.memory_space<vmem>>, vector<2x8xf32>,
    return
  }
  func.func @transform_0(%arg0: i32) -> (i32, i32, i32) {
    %c0_i32 = arith.constant 0 : i32
    %c0_i32_0 = arith.constant 0 : i32
    %c0_i32_1 = arith.constant 0 : i32
    return %arg0, %c0_i32, %c0_i32_0 : i32, i32, i32
  }
  func.func @transform_1(%arg0: i32) -> (i32, i32) {
    %c0_i32 = arith.constant 0 : i32
    %c0_i32_0 = arith.constant 0 : i32
    %c0_i32_1 = arith.constant 0 : i32
    return %c0_i32, %c0_i32_0 : i32, i32
  }
  func.func @transform_2(%arg0: i32) -> (i32, i32) {
    %c0_i32 = arith.constant 0 : i32
    %c0_i32_0 = arith.constant 0 : i32
    %c0_i32_1 = arith.constant 0 : i32
    return %c0_i32, %c0_i32_0 : i32, i32
  }
  func.func @transform_3(%arg0: i32) -> (i32, i32) {
    %c0_i32 = arith.constant 0 : i32
    %c0_i32_0 = arith.constant 0 : i32
    %c0_i32_1 = arith.constant 0 : i32
    return %c0_i32, %c0_i32_0 : i32, i32
  }
  func.func @transform_4(%arg0: i32) -> (i32, i32) {
    %c0_i32 = arith.constant 0 : i32
    %c0_i32_0 = arith.constant 0 : i32
    %c0_i32_1 = arith.constant 0 : i32
    return %c0_i32, %c0_i32_0 : i32, i32
  }
  func.func @transform_5(%arg0: i32) -> (i32, i32) {
    %c0_i32 = arith.constant 0 : i32
    %c0_i32_0 = arith.constant 0 : i32
    %c0_i32_1 = arith.constant 0 : i32
    return %c0_i32, %c0_i32_0 : i32, i32
  }
  func.func @transform_6(%arg0: i32) -> (i32, i32) {
    %c0_i32 = arith.constant 0 : i32
    %c0_i32_0 = arith.constant 0 : i32
    return %arg0, %c0_i32 : i32, i32
  }
}

</mosaic_0001>

<llo_original>
// kernel: adaptation_forward.1
$region0: #{adaptation_forward.1}
  #allocation0 [shape = 'u32[]', space=smem, size = 0x4, offset = 0x4, fixed_abs, tag = 'smem constant byte address 0x4 - core index']
  #allocation1 [shape = 'u32[144,128]{1,0:T(1,128)}', space=vmem, size = 0x12000, scoped, tag = 'internal scratch']
  %s0 = inlined_call_operand.vmem [shape: f32[2,22,32], index: 0, kind: input, shape index: {}]
  %s1 = inlined_call_operand.vmem [shape: f32[672,64], index: 1, kind: input, shape index: {}]
  %s2 = inlined_call_operand.vmem [shape: f32[896,32], index: 2, kind: input, shape index: {}]
  %s3 = inlined_call_operand.vmem [shape: f32[32,32], index: 3, kind: input, shape index: {}]
  %s4 = inlined_call_operand.vmem [shape: f32[32,8], index: 4, kind: input, shape index: {}]
  %s5 = inlined_call_operand.vmem [shape: f32[6,64], index: 5, kind: input, shape index: {}]
  %s6 = inlined_call_operand.hbm [shape: f32[2,8], index: 6, kind: output, shape index: {}]
  %s7 = sld [smem:[#allocation0]]
  $region34: #{adaptation_forward.1} parent=0
    _
  %s9 = ssub.s32 1, %s7
  %s10 = scalar_select 0, %s9, %s7
  $region1: #{adaptation_forward.1} parent=0
    #allocation2 [shape = 'u8[1024]{0}', space=vmem, size = 0x400, scoped, tag = 'output window, operand 0, single buffered']
    #allocation3 [shape = 's32[1]{0}', space=sflag, size = 0x4, scoped, tag = 'scoped memory for adaptation_forward.1']
    %11 = vsyncpa [#allocation3], 0
    // Predicated region
    $region2: #{adaptation_forward.1} parent=1 // pred_check
      _
    $region3: #{adaptation_forward.1} parent=1 // pred_check_branch
      %13 = sbr.rel (0) target = $region5
    $region4: #{adaptation_forward.1} parent=1 // pred_region
      _
    $region5: #{adaptation_forward.1} parent=1 // pred_fallthru
      _
    // Predicated region
    $region6: #{adaptation_forward.1} parent=1 // pred_check
      _
    $region7: #{adaptation_forward.1} parent=1 // pred_check_branch
      %15 = sbr.rel (0) target = $region9
    $region8: #{adaptation_forward.1} parent=1 // pred_region
      _
    $region9: #{adaptation_forward.1} parent=1 // pred_fallthru
      _
    // Predicated region
    $region10: #{adaptation_forward.1} parent=1 // pred_check
      _
    $region11: #{adaptation_forward.1} parent=1 // pred_check_branch
      %17 = sbr.rel (0) target = $region13
    $region12: #{adaptation_forward.1} parent=1 // pred_region
      _
    $region13: #{adaptation_forward.1} parent=1 // pred_fallthru
      _
    // Predicated region
    $region14: #{adaptation_forward.1} parent=1 // pred_check
      _
    $region15: #{adaptation_forward.1} parent=1 // pred_check_branch
      %19 = sbr.rel (0) target = $region17
    $region16: #{adaptation_forward.1} parent=1 // pred_region
      _
    $region17: #{adaptation_forward.1} parent=1 // pred_fallthru
      _
    // Predicated region
    $region18: #{adaptation_forward.1} parent=1 // pred_check
      _
    $region19: #{adaptation_forward.1} parent=1 // pred_check_branch
      %21 = sbr.rel (0) target = $region21
    $region20: #{adaptation_forward.1} parent=1 // pred_region
      _
    $region21: #{adaptation_forward.1} parent=1 // pred_fallthru
      _
    // Predicated region
    $region22: #{adaptation_forward.1} parent=1 // pred_check
      _
    $region23: #{adaptation_forward.1} parent=1 // pred_check_branch
      %23 = sbr.rel (0) target = $region25
    $region24: #{adaptation_forward.1} parent=1 // pred_region
      _
    $region25: #{adaptation_forward.1} parent=1 // pred_fallthru
      _
    %v24 = vld [vmem:[%s0] sm:$0xff]
    %v25 = vld [vmem:[%s0 + $0x8] sm:$0xff]
    %v26 = vld [vmem:[%s0 + $0x10] sm:$0x3f]
    %v27 = vld [vmem:[%s0 + $0x18] sm:$0xff]
    %v28 = vld [vmem:[%s0 + $0x20] sm:$0xff]
    %v29 = vld [vmem:[%s0 + $0x28] sm:$0x3f]
    %v36 = vcombine.high %v24, %v24
    %v38 = vunpack.c.l.s4 1983009808
    %v39 = vunpack.c.0.s8 %v38
    %v40 = vlaneseq
    %v41 = vshrl.u32 %v40, 7
    %v42 = vsub.s32 %v39, %v41
    %v43 = vrot.slane %v24, %v42
    %v45 = vunpack.c.l.s4 1983009808
    %v46 = vunpack.c.0.s8 %v45
    %v47 = vlaneseq
    %v48 = vshrl.u32 %v47, 7
    %v49 = vsub.s32 %v46, %v48
    %v50 = vrot.slane %v36, %v49
    %v51 = vcombine.high %v43, %v43
    %v52 = vcombine.high %v50, %v50
    %v53 = vcombine.high %v25, %v25
    %v55 = vunpack.c.l.s4 1983009808
    %v56 = vunpack.c.0.s8 %v55
    %v57 = vlaneseq
    %v58 = vshrl.u32 %v57, 7
    %v59 = vsub.s32 %v56, %v58
    %v60 = vrot.slane %v25, %v59
    %v62 = vunpack.c.l.s4 1983009808
    %v63 = vunpack.c.0.s8 %v62
    %v64 = vlaneseq
    %v65 = vshrl.u32 %v64, 7
    %v66 = vsub.s32 %v63, %v65
    %v67 = vrot.slane %v53, %v66
    %v68 = vcombine.high %v60, %v60
    %v69 = vcombine.high %v67, %v67
    %v70 = vcombine.high %v26, %v26
    %v72 = vunpack.c.l.s4 1983009808
    %v73 = vunpack.c.0.s8 %v72
    %v74 = vlaneseq
    %v75 = vshrl.u32 %v74, 7
    %v76 = vsub.s32 %v73, %v75
    %v77 = vrot.slane %v26, %v76
    %v79 = vunpack.c.l.s4 1983009808
    %v80 = vunpack.c.0.s8 %v79
    %v81 = vlaneseq
    %v82 = vshrl.u32 %v81, 7
    %v83 = vsub.s32 %v80, %v82
    %v84 = vrot.slane %v70, %v83
    %v85 = vcombine.high %v77, %v77
    %v86 = vcombine.high %v27, %v27
    %v88 = vunpack.c.l.s4 1983009808
    %v89 = vunpack.c.0.s8 %v88
    %v90 = vlaneseq
    %v91 = vshrl.u32 %v90, 7
    %v92 = vsub.s32 %v89, %v91
    %v93 = vrot.slane %v27, %v92
    %v95 = vunpack.c.l.s4 1983009808
    %v96 = vunpack.c.0.s8 %v95
    %v97 = vlaneseq
    %v98 = vshrl.u32 %v97, 7
    %v99 = vsub.s32 %v96, %v98
    %v100 = vrot.slane %v86, %v99
    %v101 = vcombine.high %v93, %v93
    %v102 = vcombine.high %v100, %v100
    %v103 = vcombine.high %v28, %v28
    %v105 = vunpack.c.l.s4 1983009808
    %v106 = vunpack.c.0.s8 %v105
    %v107 = vlaneseq
    %v108 = vshrl.u32 %v107, 7
    %v109 = vsub.s32 %v106, %v108
    %v110 = vrot.slane %v28, %v109
    %v112 = vunpack.c.l.s4 1983009808
    %v113 = vunpack.c.0.s8 %v112
    %v114 = vlaneseq
    %v115 = vshrl.u32 %v114, 7
    %v116 = vsub.s32 %v113, %v115
    %v117 = vrot.slane %v103, %v116
    %v118 = vcombine.high %v110, %v110
    %v119 = vcombine.high %v117, %v117
    %v120 = vcombine.high %v29, %v29
    %v122 = vunpack.c.l.s4 1983009808
    %v123 = vunpack.c.0.s8 %v122
    %v124 = vlaneseq
    %v125 = vshrl.u32 %v124, 7
    %v126 = vsub.s32 %v123, %v125
    %v127 = vrot.slane %v29, %v126
    %v129 = vunpack.c.l.s4 1983009808
    %v130 = vunpack.c.0.s8 %v129
    %v131 = vlaneseq
    %v132 = vshrl.u32 %v131, 7
    %v133 = vsub.s32 %v130, %v132
    %v134 = vrot.slane %v120, %v133
    %v135 = vcombine.high %v127, %v127
    %v136 = vld [vmem:[%s1] sm:$0xff]
    %v137 = vld [vmem:[%s1 + $0x8] sm:$0xff]
    %v138 = vld [vmem:[%s1 + $0x10] sm:$0xff]
    %v139 = vld [vmem:[%s1 + $0x18] sm:$0xff]
    %v140 = vld [vmem:[%s5] sm:$0x1]
    %v141 = vlaneseq
    %v142 = vshrl.u32 %v141, 7
    %v143 = vsub.s32 0, %v142
    %v144 = vrot.slane %v140, %v143
    %v145 = vcombine.low %v43, %v51
    %v146 = vcombine.low %v50, %v52
    %v148 = vunpack.c.l.s4 1983009808
    %v149 = vunpack.c.0.s8 %v148
    %v150 = vlaneseq
    %v151 = vshrl.u32 %v150, 7
    %v152 = vsub.s32 %v149, %v151
    %v153 = vrot.slane %v145, %v152
    %v155 = vunpack.c.l.s4 1983009808
    %v156 = vunpack.c.0.s8 %v155
    %v157 = vlaneseq
    %v158 = vshrl.u32 %v157, 7
    %v159 = vsub.s32 %v156, %v158
    %v160 = vrot.slane %v146, %v159
    %v161 = vcombine.low %v153, %v160
    %v162 = vcombine.low %v60, %v68
    %v163 = vcombine.low %v67, %v69
    %v165 = vunpack.c.l.s4 1983009808
    %v166 = vunpack.c.0.s8 %v165
    %v167 = vlaneseq
    %v168 = vshrl.u32 %v167, 7
    %v169 = vsub.s32 %v166, %v168
    %v170 = vrot.slane %v162, %v169
    %v172 = vunpack.c.l.s4 1983009808
    %v173 = vunpack.c.0.s8 %v172
    %v174 = vlaneseq
    %v175 = vshrl.u32 %v174, 7
    %v176 = vsub.s32 %v173, %v175
    %v177 = vrot.slane %v163, %v176
    %v178 = vcombine.low %v170, %v177
    %v179 = vcombine.low %v77, %v85
    %v180 = vcombine.low %v84, %v93
    %v182 = vunpack.c.l.s4 1983009808
    %v183 = vunpack.c.0.s8 %v182
    %v184 = vlaneseq
    %v185 = vshrl.u32 %v184, 7
    %v186 = vsub.s32 %v183, %v185
    %v187 = vrot.slane %v179, %v186
    %v189 = vunpack.c.l.s4 1983009808
    %v190 = vunpack.c.0.s8 %v189
    %v191 = vlaneseq
    %v192 = vshrl.u32 %v191, 7
    %v193 = vsub.s32 %v190, %v192
    %v194 = vrot.slane %v180, %v193
    %v195 = vcombine.low %v187, %v194
    %v196 = vcombine.low %v101, %v100
    %v197 = vcombine.low %v102, %v110
    %v199 = vunpack.c.l.s4 1983009808
    %v200 = vunpack.c.0.s8 %v199
    %v201 = vlaneseq
    %v202 = vshrl.u32 %v201, 7
    %v203 = vsub.s32 %v200, %v202
    %v204 = vrot.slane %v196, %v203
    %v206 = vunpack.c.l.s4 1983009808
    %v207 = vunpack.c.0.s8 %v206
    %v208 = vlaneseq
    %v209 = vshrl.u32 %v208, 7
    %v210 = vsub.s32 %v207, %v209
    %v211 = vrot.slane %v197, %v210
    %v212 = vcombine.low %v204, %v211
    %v213 = vcombine.low %v118, %v117
    %v214 = vcombine.low %v119, %v127
    %v216 = vunpack.c.l.s4 1983009808
    %v217 = vunpack.c.0.s8 %v216
    %v218 = vlaneseq
    %v219 = vshrl.u32 %v218, 7
    %v220 = vsub.s32 %v217, %v219
    %v221 = vrot.slane %v213, %v220
    %v223 = vunpack.c.l.s4 1983009808
    %v224 = vunpack.c.0.s8 %v223
    %v225 = vlaneseq
    %v226 = vshrl.u32 %v225, 7
    %v227 = vsub.s32 %v224, %v226
    %v228 = vrot.slane %v214, %v227
    %v229 = vcombine.low %v221, %v228
    %v230 = vcombine.low %v135, %v134
    %v232 = vunpack.c.l.s4 1983009808
    %v233 = vunpack.c.0.s8 %v232
    %v234 = vlaneseq
    %v235 = vshrl.u32 %v234, 7
    %v236 = vsub.s32 %v233, %v235
    %v237 = vrot.slane %v230, %v236
    %vm238 = vcmask 261120
    %v239 = vsel %vm238, %v161, 0
    %v241 = vsel %vm238, %v178, 0
    %v243 = vsel %vm238, %v195, 0
    %v245 = vsel %vm238, %v212, 0
    %v247 = vsel %vm238, %v229, 0
    %v249 = vsel %vm238, %v237, 0
    %251 = vmatprep.subr.mxu0 0.0
    %252 = vmatpush1.msra.mxu0 %v136
    %253 = vmatprep.subr.mxu0 0.0
    %254 = vmatpush1.msra.mxu0 %v137
    %255 = vmatprep.subr.mxu0 0.0
    %256 = vmatpush1.msra.mxu0 %v138
    %257 = vmatprep.subr.mxu0 0.0
    %258 = vmatpush1.msra.mxu0 %v139
    %259 = vmatprep.subr.mxu0 0.0
    %260 = vmatpush1.msra.mxu0 0.0
    %261 = vmatprep.subr.mxu0 0.0
    %262 = vmatpush1.msra.mxu0 0.0
    %263 = vmatprep.subr.mxu0 0.0
    %264 = vmatpush1.msra.mxu0 0.0
    %265 = vmatprep.subr.mxu0 0.0
    %266 = vmatpush1.msra.mxu0 0.0
    %267 = vmatprep.subr.mxu0 0.0
    %268 = vmatpush1.msra.mxu0 0.0
    %269 = vmatprep.subr.mxu0 0.0
    %270 = vmatpush1.msra.mxu0 0.0
    %271 = vmatprep.subr.mxu0 0.0
    %272 = vmatpush1.msra.mxu0 0.0
    %273 = vmatprep.subr.mxu0 0.0
    %274 = vmatpush1.msra.mxu0 0.0
    %275 = vmatprep.subr.mxu0 0.0
    %276 = vmatpush1.msra.mxu0 0.0
    %277 = vmatprep.subr.mxu0 0.0
    %278 = vmatpush1.msra.mxu0 0.0
    %279 = vmatprep.subr.mxu0 0.0
    %280 = vmatpush1.msra.mxu0 0.0
    %281 = vmatprep.subr.mxu0 0.0
    %282 = vmatpush1.msra.mxu0 0.0
    %283 = vmatprep.subr.mxu0 0.0
    %284 = vmatpush1.msra.mxu0 0.0
    %285 = vmatprep.subr.mxu0 0.0
    %286 = vmatpush1.msra.mxu0 0.0
    %287 = vmatprep.subr.mxu0 0.0
    %288 = vmatpush1.msra.mxu0 0.0
    %289 = vmatprep.subr.mxu0 0.0
    %290 = vmatpush1.msra.mxu0 0.0
    %291 = vmatprep.subr.mxu0 0.0
    %292 = vmatpush1.msra.mxu0 0.0
    %293 = vmatprep.subr.mxu0 0.0
    %294 = vmatpush1.msra.mxu0 0.0
    %295 = vmatprep.subr.mxu0 0.0
    %296 = vmatpush1.msra.mxu0 0.0
    %297 = vmatprep.subr.mxu0 0.0
    %298 = vmatpush1.msra.mxu0 0.0
    %299 = vmatprep.subr.mxu0 0.0
    %300 = vmatpush1.msra.mxu0 0.0
    %301 = vmatprep.subr.mxu0 0.0
    %302 = vmatpush1.msra.mxu0 0.0
    %303 = vmatprep.subr.mxu0 0.0
    %304 = vmatpush1.msra.mxu0 0.0
    %305 = vmatprep.subr.mxu0 0.0
    %306 = vmatpush1.msra.mxu0 0.0
    %307 = vmatprep.subr.mxu0 0.0
    %308 = vmatpush1.msra.mxu0 0.0
    %309 = vmatprep.subr.mxu0 0.0
    %310 = vmatpush1.msra.mxu0 0.0
    %311 = vmatprep.subr.mxu0 0.0
    %312 = vmatpush1.msra.mxu0 0.0
    %313 = vmatprep.subr.mxu0 0.0
    %314 = vmatpush1.msra.mxu0 0.0
    %315 = vmatprep.mubr.f32.mxu0 0.0
    %316 = vmatmul.mubr.f32.gmra.mrb[0].mxu0 %v239
    %v317 = vpop.f32.mrb[0].mxu0
    %v318 = vadd.f32 %v144, %v317
    %v319 = vpop.f32.mrb[0].mxu0
    %320 = vmatprep.mubr.f32.mxu0 0.0
    %321 = vmatmul.mubr.f32.gmra.mrb[0].mxu0 %v241
    %v322 = vpop.f32.mrb[0].mxu0
    %v323 = vadd.f32 %v144, %v322
    %v324 = vpop.f32.mrb[0].mxu0
    %325 = vmatprep.mubr.f32.mxu0 0.0
    %326 = vmatmul.mubr.f32.gmra.mrb[0].mxu0 %v243
    %v327 = vpop.f32.mrb[0].mxu0
    %v328 = vadd.f32 %v144, %v327
    %v329 = vpop.f32.mrb[0].mxu0
    %330 = vmatprep.mubr.f32.mxu0 0.0
    %331 = vmatmul.mubr.f32.gmra.mrb[0].mxu0 %v245
    %v332 = vpop.f32.mrb[0].mxu0
    %v333 = vadd.f32 %v144, %v332
    %v334 = vpop.f32.mrb[0].mxu0
    %335 = vmatprep.mubr.f32.mxu0 0.0
    %336 = vmatmul.mubr.f32.gmra.mrb[0].mxu0 %v247
    %v337 = vpop.f32.mrb[0].mxu0
    %v338 = vadd.f32 %v144, %v337
    %v339 = vpop.f32.mrb[0].mxu0
    %340 = vmatprep.mubr.f32.mxu0 0.0
    %341 = vmatmul.mubr.f32.gmra.mrb[0].mxu0 %v249
    %v342 = vpop.f32.mrb[0].mxu0
    %v343 = vadd.f32 %v144, %v342
    %v344 = vpop.f32.mrb[0].mxu0
    %345 = vdwg.mxu0
    %v346 = vmax.f32 %v318, 0.0
    %v347 = vmax.f32 %v323, 0.0
    %v348 = vmax.f32 %v328, 0.0
    %v349 = vmax.f32 %v333, 0.0
    %v350 = vmax.f32 %v338, 0.0
    %v351 = vmax.f32 %v343, 0.0
    %v358 = vcombine.high %v346, %v346
    %v360 = vunpack.c.l.s4 1983009808
    %v361 = vunpack.c.0.s8 %v360
    %v362 = vlaneseq
    %v363 = vshrl.u32 %v362, 7
    %v364 = vsub.s32 %v361, %v363
    %v365 = vrot.slane %v346, %v364
    %v367 = vunpack.c.l.s4 1983009808
    %v368 = vunpack.c.0.s8 %v367
    %v369 = vlaneseq
    %v370 = vshrl.u32 %v369, 7
    %v371 = vsub.s32 %v368, %v370
    %v372 = vrot.slane %v358, %v371
    %v373 = vcombine.high %v365, %v365
    %v374 = vcombine.high %v372, %v372
    %v375 = vcombine.high %v347, %v347
    %v377 = vunpack.c.l.s4 1983009808
    %v378 = vunpack.c.0.s8 %v377
    %v379 = vlaneseq
    %v380 = vshrl.u32 %v379, 7
    %v381 = vsub.s32 %v378, %v380
    %v382 = vrot.slane %v347, %v381
    %v384 = vunpack.c.l.s4 1983009808
    %v385 = vunpack.c.0.s8 %v384
    %v386 = vlaneseq
    %v387 = vshrl.u32 %v386, 7
    %v388 = vsub.s32 %v385, %v387
    %v389 = vrot.slane %v375, %v388
    %v390 = vcombine.high %v382, %v382
    %v391 = vcombine.high %v389, %v389
    %v392 = vcombine.high %v348, %v348
    %v394 = vunpack.c.l.s4 1983009808
    %v395 = vunpack.c.0.s8 %v394
    %v396 = vlaneseq
    %v397 = vshrl.u32 %v396, 7
    %v398 = vsub.s32 %v395, %v397
    %v399 = vrot.slane %v348, %v398
    %v401 = vunpack.c.l.s4 1983009808
    %v402 = vunpack.c.0.s8 %v401
    %v403 = vlaneseq
    %v404 = vshrl.u32 %v403, 7
    %v405 = vsub.s32 %v402, %v404
    %v406 = vrot.slane %v392, %v405
    %v407 = vcombine.high %v399, %v399
    %v408 = vcombine.high %v406, %v406
    %v409 = vcombine.high %v349, %v349
    %v411 = vunpack.c.l.s4 1983009808
    %v412 = vunpack.c.0.s8 %v411
    %v413 = vlaneseq
    %v414 = vshrl.u32 %v413, 7
    %v415 = vsub.s32 %v412, %v414
    %v416 = vrot.slane %v349, %v415
    %v418 = vunpack.c.l.s4 1983009808
    %v419 = vunpack.c.0.s8 %v418
    %v420 = vlaneseq
    %v421 = vshrl.u32 %v420, 7
    %v422 = vsub.s32 %v419, %v421
    %v423 = vrot.slane %v409, %v422
    %v424 = vcombine.high %v416, %v416
    %v425 = vcombine.high %v423, %v423
    %v426 = vcombine.high %v350, %v350
    %v428 = vunpack.c.l.s4 1983009808
    %v429 = vunpack.c.0.s8 %v428
    %v430 = vlaneseq
    %v431 = vshrl.u32 %v430, 7
    %v432 = vsub.s32 %v429, %v431
    %v433 = vrot.slane %v350, %v432
    %v435 = vunpack.c.l.s4 1983009808
    %v436 = vunpack.c.0.s8 %v435
    %v437 = vlaneseq
    %v438 = vshrl.u32 %v437, 7
    %v439 = vsub.s32 %v436, %v438
    %v440 = vrot.slane %v426, %v439
    %v441 = vcombine.high %v433, %v433
    %v442 = vcombine.high %v440, %v440
    %v444 = vunpack.c.l.s4 1983009808
    %v445 = vunpack.c.0.s8 %v444
    %v446 = vlaneseq
    %v447 = vshrl.u32 %v446, 7
    %v448 = vsub.s32 %v445, %v447
    %v449 = vrot.slane %v351, %v448
    %v450 = vcombine.high %v449, %v449
    %v451 = vcombine.low %v365, %v373
    %v452 = vcombine.low %v372, %v374
    %v454 = vunpack.c.l.s4 1983009808
    %v455 = vunpack.c.0.s8 %v454
    %v456 = vlaneseq
    %v457 = vshrl.u32 %v456, 7
    %v458 = vsub.s32 %v455, %v457
    %v459 = vrot.slane %v451, %v458
    %v461 = vunpack.c.l.s4 1983009808
    %v462 = vunpack.c.0.s8 %v461
    %v463 = vlaneseq
    %v464 = vshrl.u32 %v463, 7
    %v465 = vsub.s32 %v462, %v464
    %v466 = vrot.slane %v452, %v465
    %v467 = vcombine.low %v459, %v466
    %v468 = vcombine.low %v382, %v390
    %v469 = vcombine.low %v389, %v391
    %v471 = vunpack.c.l.s4 1983009808
    %v472 = vunpack.c.0.s8 %v471
    %v473 = vlaneseq
    %v474 = vshrl.u32 %v473, 7
    %v475 = vsub.s32 %v472, %v474
    %v476 = vrot.slane %v468, %v475
    %v478 = vunpack.c.l.s4 1983009808
    %v479 = vunpack.c.0.s8 %v478
    %v480 = vlaneseq
    %v481 = vshrl.u32 %v480, 7
    %v482 = vsub.s32 %v479, %v481
    %v483 = vrot.slane %v469, %v482
    %v484 = vcombine.low %v476, %v483
    %v486 = vunpack.c.l.s4 1983009808
    %v487 = vunpack.c.0.s8 %v486
    %v488 = vlaneseq
    %v489 = vshrl.u32 %v488, 7
    %v490 = vsub.s32 %v487, %v489
    %v491 = vrot.slane %v399, %v490
    %v492 = vcombine.low %v408, %v416
    %v493 = vcombine.low %v424, %v423
    %v495 = vunpack.c.l.s4 1983009808
    %v496 = vunpack.c.0.s8 %v495
    %v497 = vlaneseq
    %v498 = vshrl.u32 %v497, 7
    %v499 = vsub.s32 %v496, %v498
    %v500 = vrot.slane %v492, %v499
    %v502 = vunpack.c.l.s4 1983009808
    %v503 = vunpack.c.0.s8 %v502
    %v504 = vlaneseq
    %v505 = vshrl.u32 %v504, 7
    %v506 = vsub.s32 %v503, %v505
    %v507 = vrot.slane %v493, %v506
    %v508 = vcombine.low %v500, %v507
    %v509 = vcombine.low %v425, %v433
    %v510 = vcombine.low %v441, %v440
    %v512 = vunpack.c.l.s4 1983009808
    %v513 = vunpack.c.0.s8 %v512
    %v514 = vlaneseq
    %v515 = vshrl.u32 %v514, 7
    %v516 = vsub.s32 %v513, %v515
    %v517 = vrot.slane %v509, %v516
    %v519 = vunpack.c.l.s4 1983009808
    %v520 = vunpack.c.0.s8 %v519
    %v521 = vlaneseq
    %v522 = vshrl.u32 %v521, 7
    %v523 = vsub.s32 %v520, %v522
    %v524 = vrot.slane %v510, %v523
    %v525 = vcombine.low %v517, %v524
    %v527 = vunpack.c.l.s4 1983009808
    %v528 = vunpack.c.0.s8 %v527
    %v529 = vlaneseq
    %v530 = vshrl.u32 %v529, 7
    %v531 = vsub.s32 %v528, %v530
    %v532 = vrot.slane %v442, %v531
    %v539 = vcombine.low %v399, %v407
    %v541 = vunpack.c.l.s4 1983009808
    %v542 = vunpack.c.0.s8 %v541
    %v543 = vlaneseq
    %v544 = vshrl.u32 %v543, 7
    %v545 = vsub.s32 %v542, %v544
    %v546 = vrot.slane %v539, %v545
    %v547 = vcombine.low %v442, %v449
    %v549 = vunpack.c.l.s4 1983009808
    %v550 = vunpack.c.0.s8 %v549
    %v551 = vlaneseq
    %v552 = vshrl.u32 %v551, 7
    %v553 = vsub.s32 %v550, %v552
    %v554 = vrot.slane %v547, %v553
    %vm555 = vcmask 1046528
    %v556 = vrot.slane %v467, 1
    %v557 = vrot.slane %v484, 1
    %v558 = vsel %vm555, %v556, %v557
    %v559 = vrot.slane %v546, 1
    %v560 = vsel %vm555, %v557, %v559
    %v561 = vrot.slane %v508, 1
    %v562 = vrot.slane %v525, 1
    %v563 = vsel %vm555, %v561, %v562
    %v564 = vrot.slane %v554, 1
    %v565 = vsel %vm555, %v562, %v564
    %566 = vrot.lane.b32.xlu0 %v558, 64
    %v567 = vpop.permute.xlu0 %566
    %568 = vrot.lane.b32.xlu0 %v560, 64
    %v569 = vpop.permute.xlu0 %568
    %570 = vrot.lane.b32.xlu0 %v559, 64
    %v571 = vpop.permute.xlu0 %570
    %572 = vrot.lane.b32.xlu0 %v563, 64
    %v573 = vpop.permute.xlu0 %572
    %574 = vrot.lane.b32.xlu0 %v565, 64
    %v575 = vpop.permute.xlu0 %574
    %576 = vrot.lane.b32.xlu0 %v564, 64
    %v577 = vpop.permute.xlu0 %576
    %v584 = vcombine.low %v373, %v372
    %v585 = vcombine.low %v374, %v382
    %v587 = vunpack.c.l.s4 1983009808
    %v588 = vunpack.c.0.s8 %v587
    %v589 = vlaneseq
    %v590 = vshrl.u32 %v589, 7
    %v591 = vsub.s32 %v588, %v590
    %v592 = vrot.slane %v584, %v591
    %v594 = vunpack.c.l.s4 1983009808
    %v595 = vunpack.c.0.s8 %v594
    %v596 = vlaneseq
    %v597 = vshrl.u32 %v596, 7
    %v598 = vsub.s32 %v595, %v597
    %v599 = vrot.slane %v585, %v598
    %v600 = vcombine.low %v592, %v599
    %v601 = vcombine.low %v390, %v389
    %v602 = vcombine.low %v391, %v399
    %v604 = vunpack.c.l.s4 1983009808
    %v605 = vunpack.c.0.s8 %v604
    %v606 = vlaneseq
    %v607 = vshrl.u32 %v606, 7
    %v608 = vsub.s32 %v605, %v607
    %v609 = vrot.slane %v601, %v608
    %v611 = vunpack.c.l.s4 1983009808
    %v612 = vunpack.c.0.s8 %v611
    %v613 = vlaneseq
    %v614 = vshrl.u32 %v613, 7
    %v615 = vsub.s32 %v612, %v614
    %v616 = vrot.slane %v602, %v615
    %v617 = vcombine.low %v609, %v616
    %v619 = vunpack.c.l.s4 1983009808
    %v620 = vunpack.c.0.s8 %v619
    %v621 = vlaneseq
    %v622 = vshrl.u32 %v621, 7
    %v623 = vsub.s32 %v620, %v622
    %v624 = vrot.slane %v407, %v623
    %v625 = vcombine.low %v416, %v424
    %v626 = vcombine.low %v423, %v425
    %v628 = vunpack.c.l.s4 1983009808
    %v629 = vunpack.c.0.s8 %v628
    %v630 = vlaneseq
    %v631 = vshrl.u32 %v630, 7
    %v632 = vsub.s32 %v629, %v631
    %v633 = vrot.slane %v625, %v632
    %v635 = vunpack.c.l.s4 1983009808
    %v636 = vunpack.c.0.s8 %v635
    %v637 = vlaneseq
    %v638 = vshrl.u32 %v637, 7
    %v639 = vsub.s32 %v636, %v638
    %v640 = vrot.slane %v626, %v639
    %v641 = vcombine.low %v633, %v640
    %v642 = vcombine.low %v433, %v441
    %v643 = vcombine.low %v440, %v442
    %v645 = vunpack.c.l.s4 1983009808
    %v646 = vunpack.c.0.s8 %v645
    %v647 = vlaneseq
    %v648 = vshrl.u32 %v647, 7
    %v649 = vsub.s32 %v646, %v648
    %v650 = vrot.slane %v642, %v649
    %v652 = vunpack.c.l.s4 1983009808
    %v653 = vunpack.c.0.s8 %v652
    %v654 = vlaneseq
    %v655 = vshrl.u32 %v654, 7
    %v656 = vsub.s32 %v653, %v655
    %v657 = vrot.slane %v643, %v656
    %v658 = vcombine.low %v650, %v657
    %v660 = vunpack.c.l.s4 1983009808
    %v661 = vunpack.c.0.s8 %v660
    %v662 = vlaneseq
    %v663 = vshrl.u32 %v662, 7
    %v664 = vsub.s32 %v661, %v663
    %v665 = vrot.slane %v449, %v664
    %v672 = vcombine.low %v407, %v406
    %v674 = vunpack.c.l.s4 1983009808
    %v675 = vunpack.c.0.s8 %v674
    %v676 = vlaneseq
    %v677 = vshrl.u32 %v676, 7
    %v678 = vsub.s32 %v675, %v677
    %v679 = vrot.slane %v672, %v678
    %v680 = vcombine.low %v449, %v450
    %v682 = vunpack.c.l.s4 1983009808
    %v683 = vunpack.c.0.s8 %v682
    %v684 = vlaneseq
    %v685 = vshrl.u32 %v684, 7
    %v686 = vsub.s32 %v683, %v685
    %v687 = vrot.slane %v680, %v686
    %v688 = vrot.slane %v600, 1
    %v689 = vrot.slane %v617, 1
    %v690 = vsel %vm555, %v688, %v689
    %v691 = vrot.slane %v679, 1
    %v692 = vsel %vm555, %v689, %v691
    %v693 = vrot.slane %v641, 1
    %v694 = vrot.slane %v658, 1
    %v695 = vsel %vm555, %v693, %v694
    %v696 = vrot.slane %v687, 1
    %v697 = vsel %vm555, %v694, %v696
    %698 = vrot.lane.b32.xlu0 %v690, 64
    %v699 = vpop.permute.xlu0 %698
    %700 = vrot.lane.b32.xlu0 %v692, 64
    %v701 = vpop.permute.xlu0 %700
    %702 = vrot.lane.b32.xlu0 %v691, 64
    %v703 = vpop.permute.xlu0 %702
    %704 = vrot.lane.b32.xlu0 %v695, 64
    %v705 = vpop.permute.xlu0 %704
    %706 = vrot.lane.b32.xlu0 %v697, 64
    %v707 = vpop.permute.xlu0 %706
    %708 = vrot.lane.b32.xlu0 %v696, 64
    %v709 = vpop.permute.xlu0 %708
    %v716 = vcombine.low %v466, %v476
    %v717 = vcombine.low %v483, %v546
    %v719 = vunpack.c.l.s4 1983009808
    %v720 = vunpack.c.0.s8 %v719
    %v721 = vlaneseq
    %v722 = vshrl.u32 %v721, 7
    %v723 = vsub.s32 %v720, %v722
    %v724 = vrot.slane %v406, %v723
    %v725 = vcombine.low %v507, %v517
    %v726 = vcombine.low %v524, %v554
    %v728 = vunpack.c.l.s4 1983009808
    %v729 = vunpack.c.0.s8 %v728
    %v730 = vlaneseq
    %v731 = vshrl.u32 %v730, 7
    %v732 = vsub.s32 %v729, %v731
    %v733 = vrot.slane %v450, %v732
    %vm734 = vcmask 523264
    %v735 = vsel %vm734, %v467, %v567
    %v736 = vsel %vm734, %v484, %v569
    %v737 = vsel %vm734, %v491, %v571
    %v738 = vsel %vm734, %v508, %v573
    %v739 = vsel %vm734, %v525, %v575
    %v740 = vsel %vm734, %v532, %v577
    %v741 = vsel %vm734, %v600, %v699
    %v742 = vsel %vm734, %v617, %v701
    %v743 = vsel %vm734, %v624, %v703
    %v744 = vsel %vm734, %v641, %v705
    %v745 = vsel %vm734, %v658, %v707
    %v746 = vsel %vm734, %v665, %v709
    %v759 = vcombine.low %v735, %v741
    %v760 = vcombine.high %v735, %v741
    %v761 = vcombine.high %v716, %v716
    %v763 = vunpack.c.l.s4 1983009808
    %v764 = vunpack.c.0.s8 %v763
    %v765 = vlaneseq
    %v766 = vshrl.u32 %v765, 7
    %v767 = vsub.s32 %v764, %v766
    %v768 = vrot.slane %v759, %v767
    %v770 = vunpack.c.l.s4 1983009808
    %v771 = vunpack.c.0.s8 %v770
    %v772 = vlaneseq
    %v773 = vshrl.u32 %v772, 7
    %v774 = vsub.s32 %v771, %v773
    %v775 = vrot.slane %v760, %v774
    %v777 = vunpack.c.l.s4 1983009808
    %v778 = vunpack.c.0.s8 %v777
    %v779 = vlaneseq
    %v780 = vshrl.u32 %v779, 7
    %v781 = vsub.s32 %v778, %v780
    %v782 = vrot.slane %v716, %v781
    %v784 = vunpack.c.l.s4 1983009808
    %v785 = vunpack.c.0.s8 %v784
    %v786 = vlaneseq
    %v787 = vshrl.u32 %v786, 7
    %v788 = vsub.s32 %v785, %v787
    %v789 = vrot.slane %v761, %v788
    %v790 = vcombine.low %v768, %v782
    %v791 = vcombine.high %v768, %v782
    %v792 = vcombine.low %v775, %v789
    %v793 = vcombine.high %v775, %v789
    %v794 = vcombine.low %v736, %v742
    %v795 = vcombine.high %v736, %v742
    %v796 = vcombine.high %v717, %v717
    %v798 = vunpack.c.l.s4 1983009808
    %v799 = vunpack.c.0.s8 %v798
    %v800 = vlaneseq
    %v801 = vshrl.u32 %v800, 7
    %v802 = vsub.s32 %v799, %v801
    %v803 = vrot.slane %v794, %v802
    %v805 = vunpack.c.l.s4 1983009808
    %v806 = vunpack.c.0.s8 %v805
    %v807 = vlaneseq
    %v808 = vshrl.u32 %v807, 7
    %v809 = vsub.s32 %v806, %v808
    %v810 = vrot.slane %v795, %v809
    %v812 = vunpack.c.l.s4 1983009808
    %v813 = vunpack.c.0.s8 %v812
    %v814 = vlaneseq
    %v815 = vshrl.u32 %v814, 7
    %v816 = vsub.s32 %v813, %v815
    %v817 = vrot.slane %v717, %v816
    %v819 = vunpack.c.l.s4 1983009808
    %v820 = vunpack.c.0.s8 %v819
    %v821 = vlaneseq
    %v822 = vshrl.u32 %v821, 7
    %v823 = vsub.s32 %v820, %v822
    %v824 = vrot.slane %v796, %v823
    %v825 = vcombine.low %v803, %v817
    %v826 = vcombine.high %v803, %v817
    %v827 = vcombine.low %v810, %v824
    %v828 = vcombine.high %v810, %v824
    %v829 = vcombine.low %v737, %v743
    %v831 = vunpack.c.l.s4 1983009808
    %v832 = vunpack.c.0.s8 %v831
    %v833 = vlaneseq
    %v834 = vshrl.u32 %v833, 7
    %v835 = vsub.s32 %v832, %v834
    %v836 = vrot.slane %v829, %v835
    %v838 = vunpack.c.l.s4 1983009808
    %v839 = vunpack.c.0.s8 %v838
    %v840 = vlaneseq
    %v841 = vshrl.u32 %v840, 7
    %v842 = vsub.s32 %v839, %v841
    %v843 = vrot.slane %v724, %v842
    %v844 = vcombine.low %v836, %v843
    %v845 = vcombine.low %v738, %v744
    %v846 = vcombine.high %v738, %v744
    %v847 = vcombine.high %v725, %v725
    %v849 = vunpack.c.l.s4 1983009808
    %v850 = vunpack.c.0.s8 %v849
    %v851 = vlaneseq
    %v852 = vshrl.u32 %v851, 7
    %v853 = vsub.s32 %v850, %v852
    %v854 = vrot.slane %v845, %v853
    %v856 = vunpack.c.l.s4 1983009808
    %v857 = vunpack.c.0.s8 %v856
    %v858 = vlaneseq
    %v859 = vshrl.u32 %v858, 7
    %v860 = vsub.s32 %v857, %v859
    %v861 = vrot.slane %v846, %v860
    %v863 = vunpack.c.l.s4 1983009808
    %v864 = vunpack.c.0.s8 %v863
    %v865 = vlaneseq
    %v866 = vshrl.u32 %v865, 7
    %v867 = vsub.s32 %v864, %v866
    %v868 = vrot.slane %v725, %v867
    %v870 = vunpack.c.l.s4 1983009808
    %v871 = vunpack.c.0.s8 %v870
    %v872 = vlaneseq
    %v873 = vshrl.u32 %v872, 7
    %v874 = vsub.s32 %v871, %v873
    %v875 = vrot.slane %v847, %v874
    %v876 = vcombine.low %v854, %v868
    %v877 = vcombine.high %v854, %v868
    %v878 = vcombine.low %v861, %v875
    %v879 = vcombine.high %v861, %v875
    %v880 = vcombine.low %v739, %v745
    %v881 = vcombine.high %v739, %v745
    %v882 = vcombine.high %v726, %v726
    %v884 = vunpack.c.l.s4 1983009808
    %v885 = vunpack.c.0.s8 %v884
    %v886 = vlaneseq
    %v887 = vshrl.u32 %v886, 7
    %v888 = vsub.s32 %v885, %v887
    %v889 = vrot.slane %v880, %v888
    %v891 = vunpack.c.l.s4 1983009808
    %v892 = vunpack.c.0.s8 %v891
    %v893 = vlaneseq
    %v894 = vshrl.u32 %v893, 7
    %v895 = vsub.s32 %v892, %v894
    %v896 = vrot.slane %v881, %v895
    %v898 = vunpack.c.l.s4 1983009808
    %v899 = vunpack.c.0.s8 %v898
    %v900 = vlaneseq
    %v901 = vshrl.u32 %v900, 7
    %v902 = vsub.s32 %v899, %v901
    %v903 = vrot.slane %v726, %v902
    %v905 = vunpack.c.l.s4 1983009808
    %v906 = vunpack.c.0.s8 %v905
    %v907 = vlaneseq
    %v908 = vshrl.u32 %v907, 7
    %v909 = vsub.s32 %v906, %v908
    %v910 = vrot.slane %v882, %v909
    %v911 = vcombine.low %v889, %v903
    %v912 = vcombine.high %v889, %v903
    %v913 = vcombine.low %v896, %v910
    %v914 = vcombine.high %v896, %v910
    %v915 = vcombine.low %v740, %v746
    %v917 = vunpack.c.l.s4 1983009808
    %v918 = vunpack.c.0.s8 %v917
    %v919 = vlaneseq
    %v920 = vshrl.u32 %v919, 7
    %v921 = vsub.s32 %v918, %v920
    %v922 = vrot.slane %v915, %v921
    %v924 = vunpack.c.l.s4 1983009808
    %v925 = vunpack.c.0.s8 %v924
    %v926 = vlaneseq
    %v927 = vshrl.u32 %v926, 7
    %v928 = vsub.s32 %v925, %v927
    %v929 = vrot.slane %v733, %v928
    %v930 = vcombine.low %v922, %v929
    %v931 = vld [vmem:[%s1 + $0x20] sm:$0xff]
    %v932 = vld [vmem:[%s1 + $0x28] sm:$0xff]
    %v933 = vld [vmem:[%s1 + $0x30] sm:$0xff]
    %v934 = vld [vmem:[%s1 + $0x38] sm:$0xff]
    %v935 = vld [vmem:[%s1 + $0x40] sm:$0xff]
    %v936 = vld [vmem:[%s1 + $0x48] sm:$0xff]
    %v937 = vld [vmem:[%s1 + $0x50] sm:$0xff]
    %v938 = vld [vmem:[%s1 + $0x58] sm:$0xff]
    %v939 = vld [vmem:[%s1 + $0x60] sm:$0xff]
    %v940 = vld [vmem:[%s1 + $0x68] sm:$0xff]
    %v941 = vld [vmem:[%s1 + $0x70] sm:$0xff]
    %v942 = vld [vmem:[%s1 + $0x78] sm:$0xff]
    %v943 = vld [vmem:[%s1 + $0x80] sm:$0xff]
    %v944 = vld [vmem:[%s1 + $0x88] sm:$0xff]
    %v945 = vld [vmem:[%s1 + $0x90] sm:$0xff]
    %v946 = vld [vmem:[%s1 + $0x98] sm:$0xff]
    %v947 = vld [vmem:[%s1 + $0xa0] sm:$0xff]
    %v948 = vld [vmem:[%s1 + $0xa8] sm:$0xff]
    %v949 = vld [vmem:[%s1 + $0xb0] sm:$0xff]
    %v950 = vld [vmem:[%s1 + $0xb8] sm:$0xff]
    %v951 = vld [vmem:[%s1 + $0xc0] sm:$0xff]
    %v952 = vld [vmem:[%s1 + $0xc8] sm:$0xff]
    %v953 = vld [vmem:[%s1 + $0xd0] sm:$0xff]
    %v954 = vld [vmem:[%s1 + $0xd8] sm:$0xff]
    %v955 = vld [vmem:[%s1 + $0xe0] sm:$0xff]
    %v956 = vld [vmem:[%s1 + $0xe8] sm:$0xff]
    %v957 = vld [vmem:[%s1 + $0xf0] sm:$0xff]
    %v958 = vld [vmem:[%s1 + $0xf8] sm:$0xff]
    %v959 = vld [vmem:[%s1 + $0x100] sm:$0xff]
    %v960 = vld [vmem:[%s1 + $0x108] sm:$0xff]
    %v961 = vld [vmem:[%s1 + $0x110] sm:$0xff]
    %v962 = vld [vmem:[%s1 + $0x118] sm:$0xff]
    %v963 = vld [vmem:[%s1 + $0x120] sm:$0xff]
    %v964 = vld [vmem:[%s1 + $0x128] sm:$0xff]
    %v965 = vld [vmem:[%s1 + $0x130] sm:$0xff]
    %v966 = vld [vmem:[%s1 + $0x138] sm:$0xff]
    %v967 = vld [vmem:[%s1 + $0x140] sm:$0xff]
    %v968 = vld [vmem:[%s1 + $0x148] sm:$0xff]
    %v969 = vld [vmem:[%s1 + $0x150] sm:$0xff]
    %v970 = vld [vmem:[%s1 + $0x158] sm:$0xff]
    %v971 = vld [vmem:[%s5 + $0x1] sm:$0x1]
    %v972 = vlaneseq
    %v973 = vshrl.u32 %v972, 7
    %v974 = vsub.s32 0, %v973
    %v975 = vrot.slane %v971, %v974
    %v976 = vcombine.low %v790, %v791
    %v977 = vcombine.high %v790, %v791
    %v978 = vcombine.low %v792, %v793
    %v979 = vcombine.high %v792, %v793
    %v981 = vunpack.c.l.s4 1983009808
    %v982 = vunpack.c.0.s8 %v981
    %v983 = vlaneseq
    %v984 = vshrl.u32 %v983, 7
    %v985 = vsub.s32 %v982, %v984
    %v986 = vrot.slane %v976, %v985
    %v988 = vunpack.c.l.s4 1983009808
    %v989 = vunpack.c.0.s8 %v988
    %v990 = vlaneseq
    %v991 = vshrl.u32 %v990, 7
    %v992 = vsub.s32 %v989, %v991
    %v993 = vrot.slane %v977, %v992
    %v995 = vunpack.c.l.s4 1983009808
    %v996 = vunpack.c.0.s8 %v995
    %v997 = vlaneseq
    %v998 = vshrl.u32 %v997, 7
    %v999 = vsub.s32 %v996, %v998
    %v1000 = vrot.slane %v978, %v999
    %v1002 = vunpack.c.l.s4 1983009808
    %v1003 = vunpack.c.0.s8 %v1002
    %v1004 = vlaneseq
    %v1005 = vshrl.u32 %v1004, 7
    %v1006 = vsub.s32 %v1003, %v1005
    %v1007 = vrot.slane %v979, %v1006
    %v1008 = vcombine.low %v986, %v1000
    %v1009 = vcombine.high %v986, %v1000
    %v1010 = vcombine.low %v993, %v1007
    %v1011 = vcombine.low %v825, %v826
    %v1012 = vcombine.high %v825, %v826
    %v1013 = vcombine.low %v827, %v828
    %v1014 = vcombine.high %v827, %v828
    %v1016 = vunpack.c.l.s4 1983009808
    %v1017 = vunpack.c.0.s8 %v1016
    %v1018 = vlaneseq
    %v1019 = vshrl.u32 %v1018, 7
    %v1020 = vsub.s32 %v1017, %v1019
    %v1021 = vrot.slane %v1011, %v1020
    %v1023 = vunpack.c.l.s4 1983009808
    %v1024 = vunpack.c.0.s8 %v1023
    %v1025 = vlaneseq
    %v1026 = vshrl.u32 %v1025, 7
    %v1027 = vsub.s32 %v1024, %v1026
    %v1028 = vrot.slane %v1012, %v1027
    %v1030 = vunpack.c.l.s4 1983009808
    %v1031 = vunpack.c.0.s8 %v1030
    %v1032 = vlaneseq
    %v1033 = vshrl.u32 %v1032, 7
    %v1034 = vsub.s32 %v1031, %v1033
    %v1035 = vrot.slane %v1013, %v1034
    %v1037 = vunpack.c.l.s4 1983009808
    %v1038 = vunpack.c.0.s8 %v1037
    %v1039 = vlaneseq
    %v1040 = vshrl.u32 %v1039, 7
    %v1041 = vsub.s32 %v1038, %v1040
    %v1042 = vrot.slane %v1014, %v1041
    %v1043 = vcombine.low %v1021, %v1035
    %v1044 = vcombine.high %v1021, %v1035
    %v1045 = vcombine.low %v1028, %v1042
    %v1046 = vcombine.low %v844, %v876
    %v1047 = vcombine.high %v844, %v876
    %v1048 = vcombine.low %v877, %v878
    %v1049 = vcombine.high %v877, %v878
    %v1051 = vunpack.c.l.s4 1983009808
    %v1052 = vunpack.c.0.s8 %v1051
    %v1053 = vlaneseq
    %v1054 = vshrl.u32 %v1053, 7
    %v1055 = vsub.s32 %v1052, %v1054
    %v1056 = vrot.slane %v1046, %v1055
    %v1058 = vunpack.c.l.s4 1983009808
    %v1059 = vunpack.c.0.s8 %v1058
    %v1060 = vlaneseq
    %v1061 = vshrl.u32 %v1060, 7
    %v1062 = vsub.s32 %v1059, %v1061
    %v1063 = vrot.slane %v1047, %v1062
    %v1065 = vunpack.c.l.s4 1983009808
    %v1066 = vunpack.c.0.s8 %v1065
    %v1067 = vlaneseq
    %v1068 = vshrl.u32 %v1067, 7
    %v1069 = vsub.s32 %v1066, %v1068
    %v1070 = vrot.slane %v1048, %v1069
    %v1072 = vunpack.c.l.s4 1983009808
    %v1073 = vunpack.c.0.s8 %v1072
    %v1074 = vlaneseq
    %v1075 = vshrl.u32 %v1074, 7
    %v1076 = vsub.s32 %v1073, %v1075
    %v1077 = vrot.slane %v1049, %v1076
    %v1078 = vcombine.low %v1056, %v1070
    %v1079 = vcombine.high %v1056, %v1070
    %v1080 = vcombine.low %v1063, %v1077
    %v1081 = vcombine.low %v879, %v911
    %v1082 = vcombine.high %v879, %v911
    %v1083 = vcombine.low %v912, %v913
    %v1084 = vcombine.high %v912, %v913
    %v1086 = vunpack.c.l.s4 1983009808
    %v1087 = vunpack.c.0.s8 %v1086
    %v1088 = vlaneseq
    %v1089 = vshrl.u32 %v1088, 7
    %v1090 = vsub.s32 %v1087, %v1089
    %v1091 = vrot.slane %v1081, %v1090
    %v1093 = vunpack.c.l.s4 1983009808
    %v1094 = vunpack.c.0.s8 %v1093
    %v1095 = vlaneseq
    %v1096 = vshrl.u32 %v1095, 7
    %v1097 = vsub.s32 %v1094, %v1096
    %v1098 = vrot.slane %v1082, %v1097
    %v1100 = vunpack.c.l.s4 1983009808
    %v1101 = vunpack.c.0.s8 %v1100
    %v1102 = vlaneseq
    %v1103 = vshrl.u32 %v1102, 7
    %v1104 = vsub.s32 %v1101, %v1103
    %v1105 = vrot.slane %v1083, %v1104
    %v1107 = vunpack.c.l.s4 1983009808
    %v1108 = vunpack.c.0.s8 %v1107
    %v1109 = vlaneseq
    %v1110 = vshrl.u32 %v1109, 7
    %v1111 = vsub.s32 %v1108, %v1110
    %v1112 = vrot.slane %v1084, %v1111
    %v1113 = vcombine.low %v1091, %v1105
    %v1114 = vcombine.high %v1091, %v1105
    %v1115 = vcombine.low %v1098, %v1112
    %v1116 = vcombine.low %v914, %v930
    %v1117 = vcombine.high %v914, %v930
    %v1119 = vunpack.c.l.s4 1983009808
    %v1120 = vunpack.c.0.s8 %v1119
    %v1121 = vlaneseq
    %v1122 = vshrl.u32 %v1121, 7
    %v1123 = vsub.s32 %v1120, %v1122
    %v1124 = vrot.slane %v1116, %v1123
    %v1126 = vunpack.c.l.s4 1983009808
    %v1127 = vunpack.c.0.s8 %v1126
    %v1128 = vlaneseq
    %v1129 = vshrl.u32 %v1128, 7
    %v1130 = vsub.s32 %v1127, %v1129
    %v1131 = vrot.slane %v1117, %v1130
    %v1132 = vcombine.high %v1124, %v1124
    %v1143 = vsel %vm734, %v1010, 0
    %v1145 = vsel %vm734, %v1045, 0
    %v1147 = vsel %vm734, %v1080, 0
    %v1149 = vsel %vm734, %v1115, 0
    %v1151 = vsel %vm734, %v1131, 0
    %1153 = vmatprep.subr.mxu0 0.0
    %1154 = vmatpush1.msra.mxu0 %v931
    %1155 = vmatprep.subr.mxu0 0.0
    %1156 = vmatpush1.msra.mxu0 %v932
    %1157 = vmatprep.subr.mxu0 0.0
    %1158 = vmatpush1.msra.mxu0 %v933
    %1159 = vmatprep.subr.mxu0 0.0
    %1160 = vmatpush1.msra.mxu0 %v934
    %1161 = vmatprep.subr.mxu0 0.0
    %1162 = vmatpush1.msra.mxu0 %v935
    %1163 = vmatprep.subr.mxu0 0.0
    %1164 = vmatpush1.msra.mxu0 %v936
    %1165 = vmatprep.subr.mxu0 0.0
    %1166 = vmatpush1.msra.mxu0 %v937
    %1167 = vmatprep.subr.mxu0 0.0
    %1168 = vmatpush1.msra.mxu0 %v938
    %1169 = vmatprep.subr.mxu0 0.0
    %1170 = vmatpush1.msra.mxu0 %v939
    %1171 = vmatprep.subr.mxu0 0.0
    %1172 = vmatpush1.msra.mxu0 %v940
    %1173 = vmatprep.subr.mxu0 0.0
    %1174 = vmatpush1.msra.mxu0 %v941
    %1175 = vmatprep.subr.mxu0 0.0
    %1176 = vmatpush1.msra.mxu0 %v942
    %1177 = vmatprep.subr.mxu0 0.0
    %1178 = vmatpush1.msra.mxu0 %v943
    %1179 = vmatprep.subr.mxu0 0.0
    %1180 = vmatpush1.msra.mxu0 %v944
    %1181 = vmatprep.subr.mxu0 0.0
    %1182 = vmatpush1.msra.mxu0 %v945
    %1183 = vmatprep.subr.mxu0 0.0
    %1184 = vmatpush1.msra.mxu0 %v946
    %1185 = vmatprep.subr.mxu0 0.0
    %1186 = vmatpush1.msra.mxu0 %v947
    %1187 = vmatprep.subr.mxu0 0.0
    %1188 = vmatpush1.msra.mxu0 %v948
    %1189 = vmatprep.subr.mxu0 0.0
    %1190 = vmatpush1.msra.mxu0 %v949
    %1191 = vmatprep.subr.mxu0 0.0
    %1192 = vmatpush1.msra.mxu0 %v950
    %1193 = vmatprep.subr.mxu0 0.0
    %1194 = vmatpush1.msra.mxu0 %v951
    %1195 = vmatprep.subr.mxu0 0.0
    %1196 = vmatpush1.msra.mxu0 %v952
    %1197 = vmatprep.subr.mxu0 0.0
    %1198 = vmatpush1.msra.mxu0 %v953
    %1199 = vmatprep.subr.mxu0 0.0
    %1200 = vmatpush1.msra.mxu0 %v954
    %1201 = vmatprep.subr.mxu0 0.0
    %1202 = vmatpush1.msra.mxu0 %v955
    %1203 = vmatprep.subr.mxu0 0.0
    %1204 = vmatpush1.msra.mxu0 %v956
    %1205 = vmatprep.subr.mxu0 0.0
    %1206 = vmatpush1.msra.mxu0 %v957
    %1207 = vmatprep.subr.mxu0 0.0
    %1208 = vmatpush1.msra.mxu0 %v958
    %1209 = vmatprep.subr.mxu0 0.0
    %1210 = vmatpush1.msra.mxu0 %v959
    %1211 = vmatprep.subr.mxu0 0.0
    %1212 = vmatpush1.msra.mxu0 %v960
    %1213 = vmatprep.subr.mxu0 0.0
    %1214 = vmatpush1.msra.mxu0 %v961
    %1215 = vmatprep.subr.mxu0 0.0
    %1216 = vmatpush1.msra.mxu0 %v962
    %1217 = vmatprep.mubr.f32.mxu0 %v1009
    %1218 = vmatmul.mubr.f32.gmra.mrb[0].mxu0 %v1008
    %v1219 = vpop.f32.mrb[0].mxu0
    %v1220 = vadd.f32 %v975, %v1219
    %v1221 = vpop.f32.mrb[0].mxu0
    %1222 = vmatprep.mubr.f32.mxu0 %v1044
    %1223 = vmatmul.mubr.f32.gmra.mrb[0].mxu0 %v1043
    %v1224 = vpop.f32.mrb[0].mxu0
    %v1225 = vadd.f32 %v975, %v1224
    %v1226 = vpop.f32.mrb[0].mxu0
    %1227 = vmatprep.mubr.f32.mxu0 %v1079
    %1228 = vmatmul.mubr.f32.gmra.mrb[0].mxu0 %v1078
    %v1229 = vpop.f32.mrb[0].mxu0
    %v1230 = vadd.f32 %v975, %v1229
    %v1231 = vpop.f32.mrb[0].mxu0
    %1232 = vmatprep.mubr.f32.mxu0 %v1114
    %1233 = vmatmul.mubr.f32.gmra.mrb[0].mxu0 %v1113
    %v1234 = vpop.f32.mrb[0].mxu0
    %v1235 = vadd.f32 %v975, %v1234
    %v1236 = vpop.f32.mrb[0].mxu0
    %1237 = vmatprep.mubr.f32.mxu0 %v1132
    %1238 = vmatmul.mubr.f32.gmra.mrb[0].mxu0 %v1124
    %v1239 = vpop.f32.mrb[0].mxu0
    %v1240 = vadd.f32 %v975, %v1239
    %v1241 = vpop.f32.mrb[0].mxu0
    %1242 = vdwg.mxu0
    %1243 = vmatprep.subr.mxu0 0.0
    %1244 = vmatpush1.msra.mxu0 %v963
    %1245 = vmatprep.subr.mxu0 0.0
    %1246 = vmatpush1.msra.mxu0 %v964
    %1247 = vmatprep.subr.mxu0 0.0
    %1248 = vmatpush1.msra.mxu0 %v965
    %1249 = vmatprep.subr.mxu0 0.0
    %1250 = vmatpush1.msra.mxu0 %v966
    %1251 = vmatprep.subr.mxu0 0.0
    %1252 = vmatpush1.msra.mxu0 %v967
    %1253 = vmatprep.subr.mxu0 0.0
    %1254 = vmatpush1.msra.mxu0 %v968
    %1255 = vmatprep.subr.mxu0 0.0
    %1256 = vmatpush1.msra.mxu0 %v969
    %1257 = vmatprep.subr.mxu0 0.0
    %1258 = vmatpush1.msra.mxu0 %v970
    %1259 = vmatprep.subr.mxu0 0.0
    %1260 = vmatpush1.msra.mxu0 0.0
    %1261 = vmatprep.subr.mxu0 0.0
    %1262 = vmatpush1.msra.mxu0 0.0
    %1263 = vmatprep.subr.mxu0 0.0
    %1264 = vmatpush1.msra.mxu0 0.0
    %1265 = vmatprep.subr.mxu0 0.0
    %1266 = vmatpush1.msra.mxu0 0.0
    %1267 = vmatprep.subr.mxu0 0.0
    %1268 = vmatpush1.msra.mxu0 0.0
    %1269 = vmatprep.subr.mxu0 0.0
    %1270 = vmatpush1.msra.mxu0 0.0
    %1271 = vmatprep.subr.mxu0 0.0
    %1272 = vmatpush1.msra.mxu0 0.0
    %1273 = vmatprep.subr.mxu0 0.0
    %1274 = vmatpush1.msra.mxu0 0.0
    %1275 = vmatprep.subr.mxu0 0.0
    %1276 = vmatpush1.msra.mxu0 0.0
    %1277 = vmatprep.subr.mxu0 0.0
    %1278 = vmatpush1.msra.mxu0 0.0
    %1279 = vmatprep.subr.mxu0 0.0
    %1280 = vmatpush1.msra.mxu0 0.0
    %1281 = vmatprep.subr.mxu0 0.0
    %1282 = vmatpush1.msra.mxu0 0.0
    %1283 = vmatprep.subr.mxu0 0.0
    %1284 = vmatpush1.msra.mxu0 0.0
    %1285 = vmatprep.subr.mxu0 0.0
    %1286 = vmatpush1.msra.mxu0 0.0
    %1287 = vmatprep.subr.mxu0 0.0
    %1288 = vmatpush1.msra.mxu0 0.0
    %1289 = vmatprep.subr.mxu0 0.0
    %1290 = vmatpush1.msra.mxu0 0.0
    %1291 = vmatprep.subr.mxu0 0.0
    %1292 = vmatpush1.msra.mxu0 0.0
    %1293 = vmatprep.subr.mxu0 0.0
    %1294 = vmatpush1.msra.mxu0 0.0
    %1295 = vmatprep.subr.mxu0 0.0
    %1296 = vmatpush1.msra.mxu0 0.0
    %1297 = vmatprep.subr.mxu0 0.0
    %1298 = vmatpush1.msra.mxu0 0.0
    %1299 = vmatprep.subr.mxu0 0.0
    %1300 = vmatpush1.msra.mxu0 0.0
    %1301 = vmatprep.subr.mxu0 0.0
    %1302 = vmatpush1.msra.mxu0 0.0
    %1303 = vmatprep.subr.mxu0 0.0
    %1304 = vmatpush1.msra.mxu0 0.0
    %1305 = vmatprep.subr.mxu0 0.0
    %1306 = vmatpush1.msra.mxu0 0.0
    %1307 = vmatprep.mubr.f32.mxu0 0.0
    %1308 = vmatmul.mubr.f32.gmra.mrb[0].mxu0 %v1143
    %v1309 = vpop.f32.mrb[0].mxu0
    %v1310 = vadd.f32 %v1220, %v1309
    %v1311 = vpop.f32.mrb[0].mxu0
    %1312 = vmatprep.mubr.f32.mxu0 0.0
    %1313 = vmatmul.mubr.f32.gmra.mrb[0].mxu0 %v1145
    %v1314 = vpop.f32.mrb[0].mxu0
    %v1315 = vadd.f32 %v1225, %v1314
    %v1316 = vpop.f32.mrb[0].mxu0
    %1317 = vmatprep.mubr.f32.mxu0 0.0
    %1318 = vmatmul.mubr.f32.gmra.mrb[0].mxu0 %v1147
    %v1319 = vpop.f32.mrb[0].mxu0
    %v1320 = vadd.f32 %v1230, %v1319
    %v1321 = vpop.f32.mrb[0].mxu0
    %1322 = vmatprep.mubr.f32.mxu0 0.0
    %1323 = vmatmul.mubr.f32.gmra.mrb[0].mxu0 %v1149
    %v1324 = vpop.f32.mrb[0].mxu0
    %v1325 = vadd.f32 %v1235, %v1324
    %v1326 = vpop.f32.mrb[0].mxu0
    %1327 = vmatprep.mubr.f32.mxu0 0.0
    %1328 = vmatmul.mubr.f32.gmra.mrb[0].mxu0 %v1151
    %v1329 = vpop.f32.mrb[0].mxu0
    %v1330 = vadd.f32 %v1240, %v1329
    %v1331 = vpop.f32.mrb[0].mxu0
    %1332 = vdwg.mxu0
    %v1333 = vmax.f32 %v1310, 0.0
    %v1334 = vmax.f32 %v1315, 0.0
    %v1335 = vmax.f32 %v1320, 0.0
    %v1336 = vmax.f32 %v1325, 0.0
    %v1337 = vmax.f32 %v1330, 0.0
    %v1343 = vcombine.high %v1333, %v1333
    %v1345 = vunpack.c.l.s4 1983009808
    %v1346 = vunpack.c.0.s8 %v1345
    %v1347 = vlaneseq
    %v1348 = vshrl.u32 %v1347, 7
    %v1349 = vsub.s32 %v1346, %v1348
    %v1350 = vrot.slane %v1333, %v1349
    %v1352 = vunpack.c.l.s4 1983009808
    %v1353 = vunpack.c.0.s8 %v1352
    %v1354 = vlaneseq
    %v1355 = vshrl.u32 %v1354, 7
    %v1356 = vsub.s32 %v1353, %v1355
    %v1357 = vrot.slane %v1343, %v1356
    %v1358 = vcombine.high %v1350, %v1350
    %v1359 = vcombine.high %v1357, %v1357
    %v1360 = vcombine.high %v1334, %v1334
    %v1362 = vunpack.c.l.s4 1983009808
    %v1363 = vunpack.c.0.s8 %v1362
    %v1364 = vlaneseq
    %v1365 = vshrl.u32 %v1364, 7
    %v1366 = vsub.s32 %v1363, %v1365
    %v1367 = vrot.slane %v1334, %v1366
    %v1369 = vunpack.c.l.s4 1983009808
    %v1370 = vunpack.c.0.s8 %v1369
    %v1371 = vlaneseq
    %v1372 = vshrl.u32 %v1371, 7
    %v1373 = vsub.s32 %v1370, %v1372
    %v1374 = vrot.slane %v1360, %v1373
    %v1375 = vcombine.high %v1367, %v1367
    %v1376 = vcombine.high %v1374, %v1374
    %v1377 = vcombine.high %v1335, %v1335
    %v1379 = vunpack.c.l.s4 1983009808
    %v1380 = vunpack.c.0.s8 %v1379
    %v1381 = vlaneseq
    %v1382 = vshrl.u32 %v1381, 7
    %v1383 = vsub.s32 %v1380, %v1382
    %v1384 = vrot.slane %v1335, %v1383
    %v1386 = vunpack.c.l.s4 1983009808
    %v1387 = vunpack.c.0.s8 %v1386
    %v1388 = vlaneseq
    %v1389 = vshrl.u32 %v1388, 7
    %v1390 = vsub.s32 %v1387, %v1389
    %v1391 = vrot.slane %v1377, %v1390
    %v1392 = vcombine.high %v1384, %v1384
    %v1393 = vcombine.high %v1391, %v1391
    %v1394 = vcombine.high %v1336, %v1336
    %v1396 = vunpack.c.l.s4 1983009808
    %v1397 = vunpack.c.0.s8 %v1396
    %v1398 = vlaneseq
    %v1399 = vshrl.u32 %v1398, 7
    %v1400 = vsub.s32 %v1397, %v1399
    %v1401 = vrot.slane %v1336, %v1400
    %v1403 = vunpack.c.l.s4 1983009808
    %v1404 = vunpack.c.0.s8 %v1403
    %v1405 = vlaneseq
    %v1406 = vshrl.u32 %v1405, 7
    %v1407 = vsub.s32 %v1404, %v1406
    %v1408 = vrot.slane %v1394, %v1407
    %v1409 = vcombine.high %v1401, %v1401
    %v1410 = vcombine.high %v1408, %v1408
    %v1412 = vunpack.c.l.s4 1983009808
    %v1413 = vunpack.c.0.s8 %v1412
    %v1414 = vlaneseq
    %v1415 = vshrl.u32 %v1414, 7
    %v1416 = vsub.s32 %v1413, %v1415
    %v1417 = vrot.slane %v1337, %v1416
    %v1418 = vcombine.high %v1417, %v1417
    %v1419 = vcombine.low %v1350, %v1358
    %v1420 = vcombine.low %v1357, %v1359
    %v1422 = vunpack.c.l.s4 1983009808
    %v1423 = vunpack.c.0.s8 %v1422
    %v1424 = vlaneseq
    %v1425 = vshrl.u32 %v1424, 7
    %v1426 = vsub.s32 %v1423, %v1425
    %v1427 = vrot.slane %v1419, %v1426
    %v1429 = vunpack.c.l.s4 1983009808
    %v1430 = vunpack.c.0.s8 %v1429
    %v1431 = vlaneseq
    %v1432 = vshrl.u32 %v1431, 7
    %v1433 = vsub.s32 %v1430, %v1432
    %v1434 = vrot.slane %v1420, %v1433
    %v1435 = vcombine.low %v1427, %v1434
    %v1436 = vcombine.low %v1367, %v1375
    %v1438 = vunpack.c.l.s4 1983009808
    %v1439 = vunpack.c.0.s8 %v1438
    %v1440 = vlaneseq
    %v1441 = vshrl.u32 %v1440, 7
    %v1442 = vsub.s32 %v1439, %v1441
    %v1443 = vrot.slane %v1436, %v1442
    %v1445 = vunpack.c.l.s4 1983009808
    %v1446 = vunpack.c.0.s8 %v1445
    %v1447 = vlaneseq
    %v1448 = vshrl.u32 %v1447, 7
    %v1449 = vsub.s32 %v1446, %v1448
    %v1450 = vrot.slane %v1374, %v1449
    %v1451 = vcombine.low %v1443, %v1450
    %v1452 = vcombine.low %v1392, %v1391
    %v1453 = vcombine.low %v1393, %v1401
    %v1455 = vunpack.c.l.s4 1983009808
    %v1456 = vunpack.c.0.s8 %v1455
    %v1457 = vlaneseq
    %v1458 = vshrl.u32 %v1457, 7
    %v1459 = vsub.s32 %v1456, %v1458
    %v1460 = vrot.slane %v1452, %v1459
    %v1462 = vunpack.c.l.s4 1983009808
    %v1463 = vunpack.c.0.s8 %v1462
    %v1464 = vlaneseq
    %v1465 = vshrl.u32 %v1464, 7
    %v1466 = vsub.s32 %v1463, %v1465
    %v1467 = vrot.slane %v1453, %v1466
    %v1468 = vcombine.low %v1460, %v1467
    %v1469 = vcombine.low %v1409, %v1408
    %v1471 = vunpack.c.l.s4 1983009808
    %v1472 = vunpack.c.0.s8 %v1471
    %v1473 = vlaneseq
    %v1474 = vshrl.u32 %v1473, 7
    %v1475 = vsub.s32 %v1472, %v1474
    %v1476 = vrot.slane %v1469, %v1475
    %v1478 = vunpack.c.l.s4 1983009808
    %v1479 = vunpack.c.0.s8 %v1478
    %v1480 = vlaneseq
    %v1481 = vshrl.u32 %v1480, 7
    %v1482 = vsub.s32 %v1479, %v1481
    %v1483 = vrot.slane %v1410, %v1482
    %v1484 = vcombine.low %v1476, %v1483
    %v1489 = vcombine.low %v1374, %v1376
    %v1491 = vunpack.c.l.s4 1983009808
    %v1492 = vunpack.c.0.s8 %v1491
    %v1493 = vlaneseq
    %v1494 = vshrl.u32 %v1493, 7
    %v1495 = vsub.s32 %v1492, %v1494
    %v1496 = vrot.slane %v1489, %v1495
    %v1497 = vcombine.low %v1443, %v1496
    %v1498 = vcombine.low %v1410, %v1417
    %v1500 = vunpack.c.l.s4 1983009808
    %v1501 = vunpack.c.0.s8 %v1500
    %v1502 = vlaneseq
    %v1503 = vshrl.u32 %v1502, 7
    %v1504 = vsub.s32 %v1501, %v1503
    %v1505 = vrot.slane %v1498, %v1504
    %v1506 = vcombine.low %v1476, %v1505
    %v1507 = vrot.slane %v1435, 1
    %v1508 = vrot.slane %v1497, 1
    %v1509 = vsel %vm555, %v1507, %v1508
    %v1510 = vrot.slane %v1468, 1
    %v1511 = vrot.slane %v1506, 1
    %v1512 = vsel %vm555, %v1510, %v1511
    %1513 = vrot.lane.b32.xlu0 %v1509, 64
    %v1514 = vpop.permute.xlu0 %1513
    %1515 = vrot.lane.b32.xlu0 %v1508, 64
    %v1516 = vpop.permute.xlu0 %1515
    %1517 = vrot.lane.b32.xlu0 %v1512, 64
    %v1518 = vpop.permute.xlu0 %1517
    %1519 = vrot.lane.b32.xlu0 %v1511, 64
    %v1520 = vpop.permute.xlu0 %1519
    %v1525 = vcombine.low %v1358, %v1357
    %v1526 = vcombine.low %v1359, %v1367
    %v1528 = vunpack.c.l.s4 1983009808
    %v1529 = vunpack.c.0.s8 %v1528
    %v1530 = vlaneseq
    %v1531 = vshrl.u32 %v1530, 7
    %v1532 = vsub.s32 %v1529, %v1531
    %v1533 = vrot.slane %v1525, %v1532
    %v1535 = vunpack.c.l.s4 1983009808
    %v1536 = vunpack.c.0.s8 %v1535
    %v1537 = vlaneseq
    %v1538 = vshrl.u32 %v1537, 7
    %v1539 = vsub.s32 %v1536, %v1538
    %v1540 = vrot.slane %v1526, %v1539
    %v1541 = vcombine.low %v1533, %v1540
    %v1542 = vcombine.low %v1375, %v1374
    %v1544 = vunpack.c.l.s4 1983009808
    %v1545 = vunpack.c.0.s8 %v1544
    %v1546 = vlaneseq
    %v1547 = vshrl.u32 %v1546, 7
    %v1548 = vsub.s32 %v1545, %v1547
    %v1549 = vrot.slane %v1542, %v1548
    %v1551 = vunpack.c.l.s4 1983009808
    %v1552 = vunpack.c.0.s8 %v1551
    %v1553 = vlaneseq
    %v1554 = vshrl.u32 %v1553, 7
    %v1555 = vsub.s32 %v1552, %v1554
    %v1556 = vrot.slane %v1376, %v1555
    %v1557 = vcombine.low %v1549, %v1556
    %v1558 = vcombine.low %v1391, %v1393
    %v1559 = vcombine.low %v1401, %v1409
    %v1561 = vunpack.c.l.s4 1983009808
    %v1562 = vunpack.c.0.s8 %v1561
    %v1563 = vlaneseq
    %v1564 = vshrl.u32 %v1563, 7
    %v1565 = vsub.s32 %v1562, %v1564
    %v1566 = vrot.slane %v1558, %v1565
    %v1568 = vunpack.c.l.s4 1983009808
    %v1569 = vunpack.c.0.s8 %v1568
    %v1570 = vlaneseq
    %v1571 = vshrl.u32 %v1570, 7
    %v1572 = vsub.s32 %v1569, %v1571
    %v1573 = vrot.slane %v1559, %v1572
    %v1574 = vcombine.low %v1566, %v1573
    %v1575 = vcombine.low %v1408, %v1410
    %v1577 = vunpack.c.l.s4 1983009808
    %v1578 = vunpack.c.0.s8 %v1577
    %v1579 = vlaneseq
    %v1580 = vshrl.u32 %v1579, 7
    %v1581 = vsub.s32 %v1578, %v1580
    %v1582 = vrot.slane %v1575, %v1581
    %v1584 = vunpack.c.l.s4 1983009808
    %v1585 = vunpack.c.0.s8 %v1584
    %v1586 = vlaneseq
    %v1587 = vshrl.u32 %v1586, 7
    %v1588 = vsub.s32 %v1585, %v1587
    %v1589 = vrot.slane %v1417, %v1588
    %v1590 = vcombine.low %v1582, %v1589
    %v1595 = vcombine.low %v1376, %v1384
    %v1597 = vunpack.c.l.s4 1983009808
    %v1598 = vunpack.c.0.s8 %v1597
    %v1599 = vlaneseq
    %v1600 = vshrl.u32 %v1599, 7
    %v1601 = vsub.s32 %v1598, %v1600
    %v1602 = vrot.slane %v1595, %v1601
    %v1603 = vcombine.low %v1549, %v1602
    %v1604 = vcombine.low %v1417, %v1418
    %v1606 = vunpack.c.l.s4 1983009808
    %v1607 = vunpack.c.0.s8 %v1606
    %v1608 = vlaneseq
    %v1609 = vshrl.u32 %v1608, 7
    %v1610 = vsub.s32 %v1607, %v1609
    %v1611 = vrot.slane %v1604, %v1610
    %v1612 = vcombine.low %v1582, %v1611
    %v1613 = vrot.slane %v1541, 1
    %v1614 = vrot.slane %v1603, 1
    %v1615 = vsel %vm555, %v1613, %v1614
    %v1616 = vrot.slane %v1574, 1
    %v1617 = vrot.slane %v1612, 1
    %v1618 = vsel %vm555, %v1616, %v1617
    %1619 = vrot.lane.b32.xlu0 %v1615, 64
    %v1620 = vpop.permute.xlu0 %1619
    %1621 = vrot.lane.b32.xlu0 %v1614, 64
    %v1622 = vpop.permute.xlu0 %1621
    %1623 = vrot.lane.b32.xlu0 %v1618, 64
    %v1624 = vpop.permute.xlu0 %1623
    %1625 = vrot.lane.b32.xlu0 %v1617, 64
    %v1626 = vpop.permute.xlu0 %1625
    %v1631 = vcombine.low %v1434, %v1443
    %v1633 = vunpack.c.l.s4 1983009808
    %v1634 = vunpack.c.0.s8 %v1633
    %v1635 = vlaneseq
    %v1636 = vshrl.u32 %v1635, 7
    %v1637 = vsub.s32 %v1634, %v1636
    %v1638 = vrot.slane %v1384, %v1637
    %v1639 = vcombine.low %v1496, %v1638
    %v1640 = vcombine.low %v1467, %v1476
    %v1642 = vunpack.c.l.s4 1983009808
    %v1643 = vunpack.c.0.s8 %v1642
    %v1644 = vlaneseq
    %v1645 = vshrl.u32 %v1644, 7
    %v1646 = vsub.s32 %v1643, %v1645
    %v1647 = vrot.slane %v1418, %v1646
    %v1648 = vcombine.low %v1505, %v1647
    %v1649 = vsel %vm734, %v1435, %v1514
    %v1650 = vsel %vm734, %v1451, %v1516
    %v1651 = vsel %vm734, %v1468, %v1518
    %v1652 = vsel %vm734, %v1484, %v1520
    %v1653 = vsel %vm734, %v1541, %v1620
    %v1654 = vsel %vm734, %v1557, %v1622
    %v1655 = vsel %vm734, %v1574, %v1624
    %v1656 = vsel %vm734, %v1590, %v1626
    %v1665 = vcombine.low %v1649, %v1653
    %v1666 = vcombine.high %v1649, %v1653
    %v1667 = vcombine.high %v1631, %v1631
    %v1669 = vunpack.c.l.s4 1983009808
    %v1670 = vunpack.c.0.s8 %v1669
    %v1671 = vlaneseq
    %v1672 = vshrl.u32 %v1671, 7
    %v1673 = vsub.s32 %v1670, %v1672
    %v1674 = vrot.slane %v1665, %v1673
    %v1676 = vunpack.c.l.s4 1983009808
    %v1677 = vunpack.c.0.s8 %v1676
    %v1678 = vlaneseq
    %v1679 = vshrl.u32 %v1678, 7
    %v1680 = vsub.s32 %v1677, %v1679
    %v1681 = vrot.slane %v1666, %v1680
    %v1683 = vunpack.c.l.s4 1983009808
    %v1684 = vunpack.c.0.s8 %v1683
    %v1685 = vlaneseq
    %v1686 = vshrl.u32 %v1685, 7
    %v1687 = vsub.s32 %v1684, %v1686
    %v1688 = vrot.slane %v1631, %v1687
    %v1690 = vunpack.c.l.s4 1983009808
    %v1691 = vunpack.c.0.s8 %v1690
    %v1692 = vlaneseq
    %v1693 = vshrl.u32 %v1692, 7
    %v1694 = vsub.s32 %v1691, %v1693
    %v1695 = vrot.slane %v1667, %v1694
    %v1696 = vcombine.low %v1674, %v1688
    %v1697 = vcombine.high %v1674, %v1688
    %v1698 = vcombine.low %v1681, %v1695
    %v1699 = vcombine.high %v1681, %v1695
    %v1700 = vcombine.low %v1650, %v1654
    %v1701 = vcombine.high %v1650, %v1654
    %v1702 = vcombine.high %v1639, %v1639
    %v1704 = vunpack.c.l.s4 1983009808
    %v1705 = vunpack.c.0.s8 %v1704
    %v1706 = vlaneseq
    %v1707 = vshrl.u32 %v1706, 7
    %v1708 = vsub.s32 %v1705, %v1707
    %v1709 = vrot.slane %v1700, %v1708
    %v1711 = vunpack.c.l.s4 1983009808
    %v1712 = vunpack.c.0.s8 %v1711
    %v1713 = vlaneseq
    %v1714 = vshrl.u32 %v1713, 7
    %v1715 = vsub.s32 %v1712, %v1714
    %v1716 = vrot.slane %v1701, %v1715
    %v1718 = vunpack.c.l.s4 1983009808
    %v1719 = vunpack.c.0.s8 %v1718
    %v1720 = vlaneseq
    %v1721 = vshrl.u32 %v1720, 7
    %v1722 = vsub.s32 %v1719, %v1721
    %v1723 = vrot.slane %v1639, %v1722
    %v1725 = vunpack.c.l.s4 1983009808
    %v1726 = vunpack.c.0.s8 %v1725
    %v1727 = vlaneseq
    %v1728 = vshrl.u32 %v1727, 7
    %v1729 = vsub.s32 %v1726, %v1728
    %v1730 = vrot.slane %v1702, %v1729
    %v1731 = vcombine.low %v1709, %v1723
    %v1732 = vcombine.high %v1709, %v1723
    %v1733 = vcombine.low %v1716, %v1730
    %v1734 = vcombine.low %v1651, %v1655
    %v1735 = vcombine.high %v1651, %v1655
    %v1736 = vcombine.high %v1640, %v1640
    %v1738 = vunpack.c.l.s4 1983009808
    %v1739 = vunpack.c.0.s8 %v1738
    %v1740 = vlaneseq
    %v1741 = vshrl.u32 %v1740, 7
    %v1742 = vsub.s32 %v1739, %v1741
    %v1743 = vrot.slane %v1734, %v1742
    %v1745 = vunpack.c.l.s4 1983009808
    %v1746 = vunpack.c.0.s8 %v1745
    %v1747 = vlaneseq
    %v1748 = vshrl.u32 %v1747, 7
    %v1749 = vsub.s32 %v1746, %v1748
    %v1750 = vrot.slane %v1735, %v1749
    %v1752 = vunpack.c.l.s4 1983009808
    %v1753 = vunpack.c.0.s8 %v1752
    %v1754 = vlaneseq
    %v1755 = vshrl.u32 %v1754, 7
    %v1756 = vsub.s32 %v1753, %v1755
    %v1757 = vrot.slane %v1640, %v1756
    %v1759 = vunpack.c.l.s4 1983009808
    %v1760 = vunpack.c.0.s8 %v1759
    %v1761 = vlaneseq
    %v1762 = vshrl.u32 %v1761, 7
    %v1763 = vsub.s32 %v1760, %v1762
    %v1764 = vrot.slane %v1736, %v1763
    %v1765 = vcombine.low %v1743, %v1757
    %v1766 = vcombine.high %v1743, %v1757
    %v1767 = vcombine.low %v1750, %v1764
    %v1768 = vcombine.high %v1750, %v1764
    %v1769 = vcombine.low %v1652, %v1656
    %v1770 = vcombine.high %v1652, %v1656
    %v1771 = vcombine.high %v1648, %v1648
    %v1773 = vunpack.c.l.s4 1983009808
    %v1774 = vunpack.c.0.s8 %v1773
    %v1775 = vlaneseq
    %v1776 = vshrl.u32 %v1775, 7
    %v1777 = vsub.s32 %v1774, %v1776
    %v1778 = vrot.slane %v1769, %v1777
    %v1780 = vunpack.c.l.s4 1983009808
    %v1781 = vunpack.c.0.s8 %v1780
    %v1782 = vlaneseq
    %v1783 = vshrl.u32 %v1782, 7
    %v1784 = vsub.s32 %v1781, %v1783
    %v1785 = vrot.slane %v1770, %v1784
    %v1787 = vunpack.c.l.s4 1983009808
    %v1788 = vunpack.c.0.s8 %v1787
    %v1789 = vlaneseq
    %v1790 = vshrl.u32 %v1789, 7
    %v1791 = vsub.s32 %v1788, %v1790
    %v1792 = vrot.slane %v1648, %v1791
    %v1794 = vunpack.c.l.s4 1983009808
    %v1795 = vunpack.c.0.s8 %v1794
    %v1796 = vlaneseq
    %v1797 = vshrl.u32 %v1796, 7
    %v1798 = vsub.s32 %v1795, %v1797
    %v1799 = vrot.slane %v1771, %v1798
    %v1800 = vcombine.low %v1778, %v1792
    %v1801 = vcombine.high %v1778, %v1792
    %v1802 = vcombine.low %v1785, %v1799
    %v1803 = vld [vmem:[%s1 + $0x160] sm:$0xff]
    %v1804 = vld [vmem:[%s1 + $0x168] sm:$0xff]
    %v1805 = vld [vmem:[%s1 + $0x170] sm:$0xff]
    %v1806 = vld [vmem:[%s1 + $0x178] sm:$0xff]
    %v1807 = vld [vmem:[%s1 + $0x180] sm:$0xff]
    %v1808 = vld [vmem:[%s1 + $0x188] sm:$0xff]
    %v1809 = vld [vmem:[%s1 + $0x190] sm:$0xff]
    %v1810 = vld [vmem:[%s1 + $0x198] sm:$0xff]
    %v1811 = vld [vmem:[%s1 + $0x1a0] sm:$0xff]
    %v1812 = vld [vmem:[%s1 + $0x1a8] sm:$0xff]
    %v1813 = vld [vmem:[%s1 + $0x1b0] sm:$0xff]
    %v1814 = vld [vmem:[%s1 + $0x1b8] sm:$0xff]
    %v1815 = vld [vmem:[%s1 + $0x1c0] sm:$0xff]
    %v1816 = vld [vmem:[%s1 + $0x1c8] sm:$0xff]
    %v1817 = vld [vmem:[%s1 + $0x1d0] sm:$0xff]
    %v1818 = vld [vmem:[%s1 + $0x1d8] sm:$0xff]
    %v1819 = vld [vmem:[%s1 + $0x1e0] sm:$0xff]
    %v1820 = vld [vmem:[%s1 + $0x1e8] sm:$0xff]
    %v1821 = vld [vmem:[%s1 + $0x1f0] sm:$0xff]
    %v1822 = vld [vmem:[%s1 + $0x1f8] sm:$0xff]
    %v1823 = vld [vmem:[%s1 + $0x200] sm:$0xff]
    %v1824 = vld [vmem:[%s1 + $0x208] sm:$0xff]
    %v1825 = vld [vmem:[%s1 + $0x210] sm:$0xff]
    %v1826 = vld [vmem:[%s1 + $0x218] sm:$0xff]
    %v1827 = vld [vmem:[%s1 + $0x220] sm:$0xff]
    %v1828 = vld [vmem:[%s1 + $0x228] sm:$0xff]
    %v1829 = vld [vmem:[%s1 + $0x230] sm:$0xff]
    %v1830 = vld [vmem:[%s1 + $0x238] sm:$0xff]
    %v1831 = vld [vmem:[%s1 + $0x240] sm:$0xff]
    %v1832 = vld [vmem:[%s1 + $0x248] sm:$0xff]
    %v1833 = vld [vmem:[%s1 + $0x250] sm:$0xff]
    %v1834 = vld [vmem:[%s1 + $0x258] sm:$0xff]
    %v1835 = vld [vmem:[%s1 + $0x260] sm:$0xff]
    %v1836 = vld [vmem:[%s1 + $0x268] sm:$0xff]
    %v1837 = vld [vmem:[%s1 + $0x270] sm:$0xff]
    %v1838 = vld [vmem:[%s1 + $0x278] sm:$0xff]
    %v1839 = vld [vmem:[%s1 + $0x280] sm:$0xff]
    %v1840 = vld [vmem:[%s1 + $0x288] sm:$0xff]
    %v1841 = vld [vmem:[%s1 + $0x290] sm:$0xff]
    %v1842 = vld [vmem:[%s1 + $0x298] sm:$0xff]
    %v1843 = vld [vmem:[%s5 + $0x2] sm:$0x1]
    %v1844 = vlaneseq
    %v1845 = vshrl.u32 %v1844, 7
    %v1846 = vsub.s32 0, %v1845
    %v1847 = vrot.slane %v1843, %v1846
    %v1848 = vcombine.low %v1696, %v1697
    %v1849 = vcombine.high %v1696, %v1697
    %v1850 = vcombine.low %v1698, %v1699
    %v1851 = vcombine.high %v1698, %v1699
    %v1853 = vunpack.c.l.s4 1983009808
    %v1854 = vunpack.c.0.s8 %v1853
    %v1855 = vlaneseq
    %v1856 = vshrl.u32 %v1855, 7
    %v1857 = vsub.s32 %v1854, %v1856
    %v1858 = vrot.slane %v1848, %v1857
    %v1860 = vunpack.c.l.s4 1983009808
    %v1861 = vunpack.c.0.s8 %v1860
    %v1862 = vlaneseq
    %v1863 = vshrl.u32 %v1862, 7
    %v1864 = vsub.s32 %v1861, %v1863
    %v1865 = vrot.slane %v1849, %v1864
    %v1867 = vunpack.c.l.s4 1983009808
    %v1868 = vunpack.c.0.s8 %v1867
    %v1869 = vlaneseq
    %v1870 = vshrl.u32 %v1869, 7
    %v1871 = vsub.s32 %v1868, %v1870
    %v1872 = vrot.slane %v1850, %v1871
    %v1874 = vunpack.c.l.s4 1983009808
    %v1875 = vunpack.c.0.s8 %v1874
    %v1876 = vlaneseq
    %v1877 = vshrl.u32 %v1876, 7
    %v1878 = vsub.s32 %v1875, %v1877
    %v1879 = vrot.slane %v1851, %v1878
    %v1880 = vcombine.low %v1858, %v1872
    %v1881 = vcombine.high %v1858, %v1872
    %v1882 = vcombine.low %v1865, %v1879
    %v1883 = vcombine.low %v1731, %v1732
    %v1884 = vcombine.high %v1731, %v1732
    %v1885 = vcombine.low %v1733, %v1765
    %v1886 = vcombine.high %v1733, %v1765
    %v1888 = vunpack.c.l.s4 1983009808
    %v1889 = vunpack.c.0.s8 %v1888
    %v1890 = vlaneseq
    %v1891 = vshrl.u32 %v1890, 7
    %v1892 = vsub.s32 %v1889, %v1891
    %v1893 = vrot.slane %v1883, %v1892
    %v1895 = vunpack.c.l.s4 1983009808
    %v1896 = vunpack.c.0.s8 %v1895
    %v1897 = vlaneseq
    %v1898 = vshrl.u32 %v1897, 7
    %v1899 = vsub.s32 %v1896, %v1898
    %v1900 = vrot.slane %v1884, %v1899
    %v1902 = vunpack.c.l.s4 1983009808
    %v1903 = vunpack.c.0.s8 %v1902
    %v1904 = vlaneseq
    %v1905 = vshrl.u32 %v1904, 7
    %v1906 = vsub.s32 %v1903, %v1905
    %v1907 = vrot.slane %v1885, %v1906
    %v1909 = vunpack.c.l.s4 1983009808
    %v1910 = vunpack.c.0.s8 %v1909
    %v1911 = vlaneseq
    %v1912 = vshrl.u32 %v1911, 7
    %v1913 = vsub.s32 %v1910, %v1912
    %v1914 = vrot.slane %v1886, %v1913
    %v1915 = vcombine.low %v1893, %v1907
    %v1916 = vcombine.high %v1893, %v1907
    %v1917 = vcombine.low %v1900, %v1914
    %v1918 = vcombine.low %v1766, %v1767
    %v1919 = vcombine.high %v1766, %v1767
    %v1920 = vcombine.low %v1768, %v1800
    %v1921 = vcombine.high %v1768, %v1800
    %v1923 = vunpack.c.l.s4 1983009808
    %v1924 = vunpack.c.0.s8 %v1923
    %v1925 = vlaneseq
    %v1926 = vshrl.u32 %v1925, 7
    %v1927 = vsub.s32 %v1924, %v1926
    %v1928 = vrot.slane %v1918, %v1927
    %v1930 = vunpack.c.l.s4 1983009808
    %v1931 = vunpack.c.0.s8 %v1930
    %v1932 = vlaneseq
    %v1933 = vshrl.u32 %v1932, 7
    %v1934 = vsub.s32 %v1931, %v1933
    %v1935 = vrot.slane %v1919, %v1934
    %v1937 = vunpack.c.l.s4 1983009808
    %v1938 = vunpack.c.0.s8 %v1937
    %v1939 = vlaneseq
    %v1940 = vshrl.u32 %v1939, 7
    %v1941 = vsub.s32 %v1938, %v1940
    %v1942 = vrot.slane %v1920, %v1941
    %v1944 = vunpack.c.l.s4 1983009808
    %v1945 = vunpack.c.0.s8 %v1944
    %v1946 = vlaneseq
    %v1947 = vshrl.u32 %v1946, 7
    %v1948 = vsub.s32 %v1945, %v1947
    %v1949 = vrot.slane %v1921, %v1948
    %v1950 = vcombine.low %v1928, %v1942
    %v1951 = vcombine.high %v1928, %v1942
    %v1952 = vcombine.low %v1935, %v1949
    %v1953 = vcombine.low %v1801, %v1802
    %v1954 = vcombine.high %v1801, %v1802
    %v1956 = vunpack.c.l.s4 1983009808
    %v1957 = vunpack.c.0.s8 %v1956
    %v1958 = vlaneseq
    %v1959 = vshrl.u32 %v1958, 7
    %v1960 = vsub.s32 %v1957, %v1959
    %v1961 = vrot.slane %v1953, %v1960
    %v1963 = vunpack.c.l.s4 1983009808
    %v1964 = vunpack.c.0.s8 %v1963
    %v1965 = vlaneseq
    %v1966 = vshrl.u32 %v1965, 7
    %v1967 = vsub.s32 %v1964, %v1966
    %v1968 = vrot.slane %v1954, %v1967
    %v1969 = vcombine.high %v1961, %v1961
    %v1978 = vsel %vm734, %v1882, 0
    %v1980 = vsel %vm734, %v1917, 0
    %v1982 = vsel %vm734, %v1952, 0
    %v1984 = vsel %vm734, %v1968, 0
    %1986 = vmatprep.subr.mxu0 0.0
    %1987 = vmatpush1.msra.mxu0 %v1803
    %1988 = vmatprep.subr.mxu0 0.0
    %1989 = vmatpush1.msra.mxu0 %v1804
    %1990 = vmatprep.subr.mxu0 0.0
    %1991 = vmatpush1.msra.mxu0 %v1805
    %1992 = vmatprep.subr.mxu0 0.0
    %1993 = vmatpush1.msra.mxu0 %v1806
    %1994 = vmatprep.subr.mxu0 0.0
    %1995 = vmatpush1.msra.mxu0 %v1807
    %1996 = vmatprep.subr.mxu0 0.0
    %1997 = vmatpush1.msra.mxu0 %v1808
    %1998 = vmatprep.subr.mxu0 0.0
    %1999 = vmatpush1.msra.mxu0 %v1809
    %2000 = vmatprep.subr.mxu0 0.0
    %2001 = vmatpush1.msra.mxu0 %v1810
    %2002 = vmatprep.subr.mxu0 0.0
    %2003 = vmatpush1.msra.mxu0 %v1811
    %2004 = vmatprep.subr.mxu0 0.0
    %2005 = vmatpush1.msra.mxu0 %v1812
    %2006 = vmatprep.subr.mxu0 0.0
    %2007 = vmatpush1.msra.mxu0 %v1813
    %2008 = vmatprep.subr.mxu0 0.0
    %2009 = vmatpush1.msra.mxu0 %v1814
    %2010 = vmatprep.subr.mxu0 0.0
    %2011 = vmatpush1.msra.mxu0 %v1815
    %2012 = vmatprep.subr.mxu0 0.0
    %2013 = vmatpush1.msra.mxu0 %v1816
    %2014 = vmatprep.subr.mxu0 0.0
    %2015 = vmatpush1.msra.mxu0 %v1817
    %2016 = vmatprep.subr.mxu0 0.0
    %2017 = vmatpush1.msra.mxu0 %v1818
    %2018 = vmatprep.subr.mxu0 0.0
    %2019 = vmatpush1.msra.mxu0 %v1819
    %2020 = vmatprep.subr.mxu0 0.0
    %2021 = vmatpush1.msra.mxu0 %v1820
    %2022 = vmatprep.subr.mxu0 0.0
    %2023 = vmatpush1.msra.mxu0 %v1821
    %2024 = vmatprep.subr.mxu0 0.0
    %2025 = vmatpush1.msra.mxu0 %v1822
    %2026 = vmatprep.subr.mxu0 0.0
    %2027 = vmatpush1.msra.mxu0 %v1823
    %2028 = vmatprep.subr.mxu0 0.0
    %2029 = vmatpush1.msra.mxu0 %v1824
    %2030 = vmatprep.subr.mxu0 0.0
    %2031 = vmatpush1.msra.mxu0 %v1825
    %2032 = vmatprep.subr.mxu0 0.0
    %2033 = vmatpush1.msra.mxu0 %v1826
    %2034 = vmatprep.subr.mxu0 0.0
    %2035 = vmatpush1.msra.mxu0 %v1827
    %2036 = vmatprep.subr.mxu0 0.0
    %2037 = vmatpush1.msra.mxu0 %v1828
    %2038 = vmatprep.subr.mxu0 0.0
    %2039 = vmatpush1.msra.mxu0 %v1829
    %2040 = vmatprep.subr.mxu0 0.0
    %2041 = vmatpush1.msra.mxu0 %v1830
    %2042 = vmatprep.subr.mxu0 0.0
    %2043 = vmatpush1.msra.mxu0 %v1831
    %2044 = vmatprep.subr.mxu0 0.0
    %2045 = vmatpush1.msra.mxu0 %v1832
    %2046 = vmatprep.subr.mxu0 0.0
    %2047 = vmatpush1.msra.mxu0 %v1833
    %2048 = vmatprep.subr.mxu0 0.0
    %2049 = vmatpush1.msra.mxu0 %v1834
    %2050 = vmatprep.mubr.f32.mxu0 %v1881
    %2051 = vmatmul.mubr.f32.gmra.mrb[0].mxu0 %v1880
    %v2052 = vpop.f32.mrb[0].mxu0
    %v2053 = vadd.f32 %v1847, %v2052
    %v2054 = vpop.f32.mrb[0].mxu0
    %2055 = vmatprep.mubr.f32.mxu0 %v1916
    %2056 = vmatmul.mubr.f32.gmra.mrb[0].mxu0 %v1915
    %v2057 = vpop.f32.mrb[0].mxu0
    %v2058 = vadd.f32 %v1847, %v2057
    %v2059 = vpop.f32.mrb[0].mxu0
    %2060 = vmatprep.mubr.f32.mxu0 %v1951
    %2061 = vmatmul.mubr.f32.gmra.mrb[0].mxu0 %v1950
    %v2062 = vpop.f32.mrb[0].mxu0
    %v2063 = vadd.f32 %v1847, %v2062
    %v2064 = vpop.f32.mrb[0].mxu0
    %2065 = vmatprep.mubr.f32.mxu0 %v1969
    %2066 = vmatmul.mubr.f32.gmra.mrb[0].mxu0 %v1961
    %v2067 = vpop.f32.mrb[0].mxu0
    %v2068 = vadd.f32 %v1847, %v2067
    %v2069 = vpop.f32.mrb[0].mxu0
    %2070 = vdwg.mxu0
    %2071 = vmatprep.subr.mxu0 0.0
    %2072 = vmatpush1.msra.mxu0 %v1835
    %2073 = vmatprep.subr.mxu0 0.0
    %2074 = vmatpush1.msra.mxu0 %v1836
    %2075 = vmatprep.subr.mxu0 0.0
    %2076 = vmatpush1.msra.mxu0 %v1837
    %2077 = vmatprep.subr.mxu0 0.0
    %2078 = vmatpush1.msra.mxu0 %v1838
    %2079 = vmatprep.subr.mxu0 0.0
    %2080 = vmatpush1.msra.mxu0 %v1839
    %2081 = vmatprep.subr.mxu0 0.0
    %2082 = vmatpush1.msra.mxu0 %v1840
    %2083 = vmatprep.subr.mxu0 0.0
    %2084 = vmatpush1.msra.mxu0 %v1841
    %2085 = vmatprep.subr.mxu0 0.0
    %2086 = vmatpush1.msra.mxu0 %v1842
    %2087 = vmatprep.subr.mxu0 0.0
    %2088 = vmatpush1.msra.mxu0 0.0
    %2089 = vmatprep.subr.mxu0 0.0
    %2090 = vmatpush1.msra.mxu0 0.0
    %2091 = vmatprep.subr.mxu0 0.0
    %2092 = vmatpush1.msra.mxu0 0.0
    %2093 = vmatprep.subr.mxu0 0.0
    %2094 = vmatpush1.msra.mxu0 0.0
    %2095 = vmatprep.subr.mxu0 0.0
    %2096 = vmatpush1.msra.mxu0 0.0
    %2097 = vmatprep.subr.mxu0 0.0
    %2098 = vmatpush1.msra.mxu0 0.0
    %2099 = vmatprep.subr.mxu0 0.0
    %2100 = vmatpush1.msra.mxu0 0.0
    %2101 = vmatprep.subr.mxu0 0.0
    %2102 = vmatpush1.msra.mxu0 0.0
    %2103 = vmatprep.subr.mxu0 0.0
    %2104 = vmatpush1.msra.mxu0 0.0
    %2105 = vmatprep.subr.mxu0 0.0
    %2106 = vmatpush1.msra.mxu0 0.0
    %2107 = vmatprep.subr.mxu0 0.0
    %2108 = vmatpush1.msra.mxu0 0.0
    %2109 = vmatprep.subr.mxu0 0.0
    %2110 = vmatpush1.msra.mxu0 0.0
    %2111 = vmatprep.subr.mxu0 0.0
    %2112 = vmatpush1.msra.mxu0 0.0
    %2113 = vmatprep.subr.mxu0 0.0
    %2114 = vmatpush1.msra.mxu0 0.0
    %2115 = vmatprep.subr.mxu0 0.0
    %2116 = vmatpush1.msra.mxu0 0.0
    %2117 = vmatprep.subr.mxu0 0.0
    %2118 = vmatpush1.msra.mxu0 0.0
    %2119 = vmatprep.subr.mxu0 0.0
    %2120 = vmatpush1.msra.mxu0 0.0
    %2121 = vmatprep.subr.mxu0 0.0
    %2122 = vmatpush1.msra.mxu0 0.0
    %2123 = vmatprep.subr.mxu0 0.0
    %2124 = vmatpush1.msra.mxu0 0.0
    %2125 = vmatprep.subr.mxu0 0.0
    %2126 = vmatpush1.msra.mxu0 0.0
    %2127 = vmatprep.subr.mxu0 0.0
    %2128 = vmatpush1.msra.mxu0 0.0
    %2129 = vmatprep.subr.mxu0 0.0
    %2130 = vmatpush1.msra.mxu0 0.0
    %2131 = vmatprep.subr.mxu0 0.0
    %2132 = vmatpush1.msra.mxu0 0.0
    %2133 = vmatprep.subr.mxu0 0.0
    %2134 = vmatpush1.msra.mxu0 0.0
    %2135 = vmatprep.mubr.f32.mxu0 0.0
    %2136 = vmatmul.mubr.f32.gmra.mrb[0].mxu0 %v1978
    %v2137 = vpop.f32.mrb[0].mxu0
    %v2138 = vadd.f32 %v2053, %v2137
    %v2139 = vpop.f32.mrb[0].mxu0
    %2140 = vmatprep.mubr.f32.mxu0 0.0
    %2141 = vmatmul.mubr.f32.gmra.mrb[0].mxu0 %v1980
    %v2142 = vpop.f32.mrb[0].mxu0
    %v2143 = vadd.f32 %v2058, %v2142
    %v2144 = vpop.f32.mrb[0].mxu0
    %2145 = vmatprep.mubr.f32.mxu0 0.0
    %2146 = vmatmul.mubr.f32.gmra.mrb[0].mxu0 %v1982
    %v2147 = vpop.f32.mrb[0].mxu0
    %v2148 = vadd.f32 %v2063, %v2147
    %v2149 = vpop.f32.mrb[0].mxu0
    %2150 = vmatprep.mubr.f32.mxu0 0.0
    %2151 = vmatmul.mubr.f32.gmra.mrb[0].mxu0 %v1984
    %v2152 = vpop.f32.mrb[0].mxu0
    %v2153 = vadd.f32 %v2068, %v2152
    %v2154 = vpop.f32.mrb[0].mxu0
    %2155 = vdwg.mxu0
    %v2156 = vmax.f32 %v2138, 0.0
    %v2157 = vmax.f32 %v2143, 0.0
    %v2158 = vmax.f32 %v2148, 0.0
    %v2159 = vmax.f32 %v2153, 0.0
    %v2164 = vcombine.high %v2156, %v2156
    %v2166 = vunpack.c.l.s4 1983009808
    %v2167 = vunpack.c.0.s8 %v2166
    %v2168 = vlaneseq
    %v2169 = vshrl.u32 %v2168, 7
    %v2170 = vsub.s32 %v2167, %v2169
    %v2171 = vrot.slane %v2156, %v2170
    %v2173 = vunpack.c.l.s4 1983009808
    %v2174 = vunpack.c.0.s8 %v2173
    %v2175 = vlaneseq
    %v2176 = vshrl.u32 %v2175, 7
    %v2177 = vsub.s32 %v2174, %v2176
    %v2178 = vrot.slane %v2164, %v2177
    %v2179 = vcombine.high %v2171, %v2171
    %v2180 = vcombine.high %v2178, %v2178
    %v2181 = vcombine.high %v2157, %v2157
    %v2183 = vunpack.c.l.s4 1983009808
    %v2184 = vunpack.c.0.s8 %v2183
    %v2185 = vlaneseq
    %v2186 = vshrl.u32 %v2185, 7
    %v2187 = vsub.s32 %v2184, %v2186
    %v2188 = vrot.slane %v2157, %v2187
    %v2190 = vunpack.c.l.s4 1983009808
    %v2191 = vunpack.c.0.s8 %v2190
    %v2192 = vlaneseq
    %v2193 = vshrl.u32 %v2192, 7
    %v2194 = vsub.s32 %v2191, %v2193
    %v2195 = vrot.slane %v2181, %v2194
    %v2196 = vcombine.high %v2188, %v2188
    %v2197 = vcombine.high %v2195, %v2195
    %v2198 = vcombine.high %v2158, %v2158
    %v2200 = vunpack.c.l.s4 1983009808
    %v2201 = vunpack.c.0.s8 %v2200
    %v2202 = vlaneseq
    %v2203 = vshrl.u32 %v2202, 7
    %v2204 = vsub.s32 %v2201, %v2203
    %v2205 = vrot.slane %v2158, %v2204
    %v2207 = vunpack.c.l.s4 1983009808
    %v2208 = vunpack.c.0.s8 %v2207
    %v2209 = vlaneseq
    %v2210 = vshrl.u32 %v2209, 7
    %v2211 = vsub.s32 %v2208, %v2210
    %v2212 = vrot.slane %v2198, %v2211
    %v2213 = vcombine.high %v2205, %v2205
    %v2214 = vcombine.high %v2212, %v2212
    %v2216 = vunpack.c.l.s4 1983009808
    %v2217 = vunpack.c.0.s8 %v2216
    %v2218 = vlaneseq
    %v2219 = vshrl.u32 %v2218, 7
    %v2220 = vsub.s32 %v2217, %v2219
    %v2221 = vrot.slane %v2159, %v2220
    %v2222 = vcombine.high %v2221, %v2221
    %v2223 = vlaneseq
    %v2224 = vshrl.u32 %v2223, 7
    %v2225 = vsub.s32 0, %v2224
    %v2226 = vrot.slane %v2171, %v2225
    %v2227 = vlaneseq
    %v2228 = vshrl.u32 %v2227, 7
    %v2229 = vsub.s32 0, %v2228
    %v2230 = vrot.slane %v2197, %v2229
    %vm2231 = vcmask 1041409
    %v2232 = vsel %vm2231, %v2230, %v2226
    %v2234 = vlaneseq
    %v2235 = vshrl.u32 %v2234, 7
    %v2236 = vsub.s32 1, %v2235
    %v2237 = vrot.slane %v2171, %v2236
    %v2238 = vlaneseq
    %v2239 = vshrl.u32 %v2238, 7
    %v2240 = vsub.s32 1, %v2239
    %v2241 = vrot.slane %v2197, %v2240
    %v2242 = vsel %vm2231, %v2241, %v2237
    %2243 = vrot.lane.b32.xlu0 %v2242, 64
    %v2244 = vpop.permute.xlu0 %2243
    %v2246 = vlaneseq
    %v2247 = vshrl.u32 %v2246, 7
    %v2248 = vsub.s32 0, %v2247
    %v2249 = vrot.slane %v2179, %v2248
    %v2250 = vlaneseq
    %v2251 = vshrl.u32 %v2250, 7
    %v2252 = vsub.s32 0, %v2251
    %v2253 = vrot.slane %v2205, %v2252
    %v2254 = vsel %vm2231, %v2253, %v2249
    %v2256 = vlaneseq
    %v2257 = vshrl.u32 %v2256, 7
    %v2258 = vsub.s32 1, %v2257
    %v2259 = vrot.slane %v2179, %v2258
    %v2260 = vlaneseq
    %v2261 = vshrl.u32 %v2260, 7
    %v2262 = vsub.s32 1, %v2261
    %v2263 = vrot.slane %v2205, %v2262
    %v2264 = vsel %vm2231, %v2263, %v2259
    %2265 = vrot.lane.b32.xlu0 %v2264, 64
    %v2266 = vpop.permute.xlu0 %2265
    %v2268 = vlaneseq
    %v2269 = vshrl.u32 %v2268, 7
    %v2270 = vsub.s32 0, %v2269
    %v2271 = vrot.slane %v2178, %v2270
    %v2272 = vlaneseq
    %v2273 = vshrl.u32 %v2272, 7
    %v2274 = vsub.s32 0, %v2273
    %v2275 = vrot.slane %v2213, %v2274
    %v2276 = vsel %vm2231, %v2275, %v2271
    %v2278 = vlaneseq
    %v2279 = vshrl.u32 %v2278, 7
    %v2280 = vsub.s32 1, %v2279
    %v2281 = vrot.slane %v2178, %v2280
    %v2282 = vlaneseq
    %v2283 = vshrl.u32 %v2282, 7
    %v2284 = vsub.s32 1, %v2283
    %v2285 = vrot.slane %v2213, %v2284
    %v2286 = vsel %vm2231, %v2285, %v2281
    %2287 = vrot.lane.b32.xlu0 %v2286, 64
    %v2288 = vpop.permute.xlu0 %2287
    %v2290 = vlaneseq
    %v2291 = vshrl.u32 %v2290, 7
    %v2292 = vsub.s32 0, %v2291
    %v2293 = vrot.slane %v2180, %v2292
    %v2294 = vlaneseq
    %v2295 = vshrl.u32 %v2294, 7
    %v2296 = vsub.s32 0, %v2295
    %v2297 = vrot.slane %v2212, %v2296
    %v2298 = vsel %vm2231, %v2297, %v2293
    %v2300 = vlaneseq
    %v2301 = vshrl.u32 %v2300, 7
    %v2302 = vsub.s32 1, %v2301
    %v2303 = vrot.slane %v2180, %v2302
    %v2304 = vlaneseq
    %v2305 = vshrl.u32 %v2304, 7
    %v2306 = vsub.s32 1, %v2305
    %v2307 = vrot.slane %v2212, %v2306
    %v2308 = vsel %vm2231, %v2307, %v2303
    %2309 = vrot.lane.b32.xlu0 %v2308, 64
    %v2310 = vpop.permute.xlu0 %2309
    %v2312 = vlaneseq
    %v2313 = vshrl.u32 %v2312, 7
    %v2314 = vsub.s32 0, %v2313
    %v2315 = vrot.slane %v2188, %v2314
    %v2316 = vlaneseq
    %v2317 = vshrl.u32 %v2316, 7
    %v2318 = vsub.s32 0, %v2317
    %v2319 = vrot.slane %v2214, %v2318
    %v2320 = vsel %vm2231, %v2319, %v2315
    %v2322 = vlaneseq
    %v2323 = vshrl.u32 %v2322, 7
    %v2324 = vsub.s32 1, %v2323
    %v2325 = vrot.slane %v2188, %v2324
    %v2326 = vlaneseq
    %v2327 = vshrl.u32 %v2326, 7
    %v2328 = vsub.s32 1, %v2327
    %v2329 = vrot.slane %v2214, %v2328
    %v2330 = vsel %vm2231, %v2329, %v2325
    %2331 = vrot.lane.b32.xlu0 %v2330, 64
    %v2332 = vpop.permute.xlu0 %2331
    %v2334 = vlaneseq
    %v2335 = vshrl.u32 %v2334, 7
    %v2336 = vsub.s32 0, %v2335
    %v2337 = vrot.slane %v2196, %v2336
    %v2338 = vlaneseq
    %v2339 = vshrl.u32 %v2338, 7
    %v2340 = vsub.s32 0, %v2339
    %v2341 = vrot.slane %v2221, %v2340
    %v2342 = vsel %vm2231, %v2341, %v2337
    %v2344 = vlaneseq
    %v2345 = vshrl.u32 %v2344, 7
    %v2346 = vsub.s32 1, %v2345
    %v2347 = vrot.slane %v2196, %v2346
    %v2348 = vlaneseq
    %v2349 = vshrl.u32 %v2348, 7
    %v2350 = vsub.s32 1, %v2349
    %v2351 = vrot.slane %v2221, %v2350
    %v2352 = vsel %vm2231, %v2351, %v2347
    %2353 = vrot.lane.b32.xlu0 %v2352, 64
    %v2354 = vpop.permute.xlu0 %2353
    %v2356 = vlaneseq
    %v2357 = vshrl.u32 %v2356, 7
    %v2358 = vsub.s32 0, %v2357
    %v2359 = vrot.slane %v2195, %v2358
    %v2360 = vlaneseq
    %v2361 = vshrl.u32 %v2360, 7
    %v2362 = vsub.s32 0, %v2361
    %v2363 = vrot.slane %v2222, %v2362
    %v2364 = vsel %vm2231, %v2363, %v2359
    %v2366 = vlaneseq
    %v2367 = vshrl.u32 %v2366, 7
    %v2368 = vsub.s32 1, %v2367
    %v2369 = vrot.slane %v2195, %v2368
    %v2370 = vlaneseq
    %v2371 = vshrl.u32 %v2370, 7
    %v2372 = vsub.s32 1, %v2371
    %v2373 = vrot.slane %v2222, %v2372
    %v2374 = vsel %vm2231, %v2373, %v2369
    %2375 = vrot.lane.b32.xlu0 %v2374, 64
    %v2376 = vpop.permute.xlu0 %2375
    %v2378 = vsel %vm734, %v2232, %v2244
    %v2379 = vsel %vm734, %v2254, %v2266
    %v2380 = vsel %vm734, %v2276, %v2288
    %v2381 = vsel %vm734, %v2298, %v2310
    %v2382 = vsel %vm734, %v2320, %v2332
    %v2383 = vsel %vm734, %v2342, %v2354
    %v2384 = vsel %vm734, %v2364, %v2376
    %v2385 = vld [vmem:[%s2] sm:$0xff]
    %v2386 = vld [vmem:[%s2 + $0x8] sm:$0xff]
    %v2387 = vld [vmem:[%s2 + $0x10] sm:$0xff]
    %v2388 = vld [vmem:[%s2 + $0x18] sm:$0xff]
    %v2389 = vld [vmem:[%s2 + $0x20] sm:$0xff]
    %v2390 = vld [vmem:[%s2 + $0x28] sm:$0xff]
    %v2391 = vld [vmem:[%s2 + $0x30] sm:$0xff]
    %v2392 = vld [vmem:[%s2 + $0x38] sm:$0xff]
    %v2393 = vld [vmem:[%s2 + $0x40] sm:$0xff]
    %v2394 = vld [vmem:[%s2 + $0x48] sm:$0xff]
    %v2395 = vld [vmem:[%s2 + $0x50] sm:$0xff]
    %v2396 = vld [vmem:[%s2 + $0x58] sm:$0xff]
    %v2397 = vld [vmem:[%s2 + $0x60] sm:$0xff]
    %v2398 = vld [vmem:[%s2 + $0x68] sm:$0xff]
    %v2399 = vld [vmem:[%s2 + $0x70] sm:$0xff]
    %v2400 = vld [vmem:[%s2 + $0x78] sm:$0xff]
    %v2401 = vld [vmem:[%s2 + $0x80] sm:$0xff]
    %v2402 = vld [vmem:[%s2 + $0x88] sm:$0xff]
    %v2403 = vld [vmem:[%s2 + $0x90] sm:$0xff]
    %v2404 = vld [vmem:[%s2 + $0x98] sm:$0xff]
    %v2405 = vld [vmem:[%s2 + $0xa0] sm:$0xff]
    %v2406 = vld [vmem:[%s2 + $0xa8] sm:$0xff]
    %v2407 = vld [vmem:[%s2 + $0xb0] sm:$0xff]
    %v2408 = vld [vmem:[%s2 + $0xb8] sm:$0xff]
    %v2409 = vld [vmem:[%s2 + $0xc0] sm:$0xff]
    %v2410 = vld [vmem:[%s2 + $0xc8] sm:$0xff]
    %v2411 = vld [vmem:[%s2 + $0xd0] sm:$0xff]
    %v2412 = vld [vmem:[%s2 + $0xd8] sm:$0xff]
    %v2413 = vld [vmem:[%s2 + $0xe0] sm:$0xff]
    %v2414 = vld [vmem:[%s2 + $0xe8] sm:$0xff]
    %v2415 = vld [vmem:[%s2 + $0xf0] sm:$0xff]
    %v2416 = vld [vmem:[%s2 + $0xf8] sm:$0xff]
    %v2417 = vld [vmem:[%s2 + $0x100] sm:$0xff]
    %v2418 = vld [vmem:[%s2 + $0x108] sm:$0xff]
    %v2419 = vld [vmem:[%s2 + $0x110] sm:$0xff]
    %v2420 = vld [vmem:[%s2 + $0x118] sm:$0xff]
    %v2421 = vld [vmem:[%s2 + $0x120] sm:$0xff]
    %v2422 = vld [vmem:[%s2 + $0x128] sm:$0xff]
    %v2423 = vld [vmem:[%s2 + $0x130] sm:$0xff]
    %v2424 = vld [vmem:[%s2 + $0x138] sm:$0xff]
    %v2425 = vld [vmem:[%s2 + $0x140] sm:$0xff]
    %v2426 = vld [vmem:[%s2 + $0x148] sm:$0xff]
    %v2427 = vld [vmem:[%s2 + $0x150] sm:$0xff]
    %v2428 = vld [vmem:[%s2 + $0x158] sm:$0xff]
    %v2429 = vld [vmem:[%s2 + $0x160] sm:$0xff]
    %v2430 = vld [vmem:[%s2 + $0x168] sm:$0xff]
    %v2431 = vld [vmem:[%s2 + $0x170] sm:$0xff]
    %v2432 = vld [vmem:[%s2 + $0x178] sm:$0xff]
    %v2433 = vld [vmem:[%s2 + $0x180] sm:$0xff]
    %v2434 = vld [vmem:[%s2 + $0x188] sm:$0xff]
    %v2435 = vld [vmem:[%s2 + $0x190] sm:$0xff]
    %v2436 = vld [vmem:[%s2 + $0x198] sm:$0xff]
    %v2437 = vld [vmem:[%s2 + $0x1a0] sm:$0xff]
    %v2438 = vld [vmem:[%s2 + $0x1a8] sm:$0xff]
    %v2439 = vld [vmem:[%s2 + $0x1b0] sm:$0xff]
    %v2440 = vld [vmem:[%s2 + $0x1b8] sm:$0xff]
    %v2441 = vld [vmem:[%s2 + $0x1c0] sm:$0xff]
    %v2442 = vld [vmem:[%s2 + $0x1c8] sm:$0xff]
    %v2443 = vld [vmem:[%s2 + $0x1d0] sm:$0xff]
    %v2444 = vld [vmem:[%s2 + $0x1d8] sm:$0xff]
    %v2445 = vld [vmem:[%s2 + $0x1e0] sm:$0xff]
    %v2446 = vld [vmem:[%s2 + $0x1e8] sm:$0xff]
    %v2447 = vld [vmem:[%s2 + $0x1f0] sm:$0xff]
    %v2448 = vld [vmem:[%s2 + $0x1f8] sm:$0xff]
    %v2449 = vld [vmem:[%s2 + $0x200] sm:$0xff]
    %v2450 = vld [vmem:[%s2 + $0x208] sm:$0xff]
    %v2451 = vld [vmem:[%s2 + $0x210] sm:$0xff]
    %v2452 = vld [vmem:[%s2 + $0x218] sm:$0xff]
    %v2453 = vld [vmem:[%s2 + $0x220] sm:$0xff]
    %v2454 = vld [vmem:[%s2 + $0x228] sm:$0xff]
    %v2455 = vld [vmem:[%s2 + $0x230] sm:$0xff]
    %v2456 = vld [vmem:[%s2 + $0x238] sm:$0xff]
    %v2457 = vld [vmem:[%s2 + $0x240] sm:$0xff]
    %v2458 = vld [vmem:[%s2 + $0x248] sm:$0xff]
    %v2459 = vld [vmem:[%s2 + $0x250] sm:$0xff]
    %v2460 = vld [vmem:[%s2 + $0x258] sm:$0xff]
    %v2461 = vld [vmem:[%s2 + $0x260] sm:$0xff]
    %v2462 = vld [vmem:[%s2 + $0x268] sm:$0xff]
    %v2463 = vld [vmem:[%s2 + $0x270] sm:$0xff]
    %v2464 = vld [vmem:[%s2 + $0x278] sm:$0xff]
    %v2465 = vld [vmem:[%s2 + $0x280] sm:$0xff]
    %v2466 = vld [vmem:[%s2 + $0x288] sm:$0xff]
    %v2467 = vld [vmem:[%s2 + $0x290] sm:$0xff]
    %v2468 = vld [vmem:[%s2 + $0x298] sm:$0xff]
    %v2469 = vld [vmem:[%s2 + $0x2a0] sm:$0xff]
    %v2470 = vld [vmem:[%s2 + $0x2a8] sm:$0xff]
    %v2471 = vld [vmem:[%s2 + $0x2b0] sm:$0xff]
    %v2472 = vld [vmem:[%s2 + $0x2b8] sm:$0xff]
    %v2473 = vld [vmem:[%s2 + $0x2c0] sm:$0xff]
    %v2474 = vld [vmem:[%s2 + $0x2c8] sm:$0xff]
    %v2475 = vld [vmem:[%s2 + $0x2d0] sm:$0xff]
    %v2476 = vld [vmem:[%s2 + $0x2d8] sm:$0xff]
    %v2477 = vld [vmem:[%s2 + $0x2e0] sm:$0xff]
    %v2478 = vld [vmem:[%s2 + $0x2e8] sm:$0xff]
    %v2479 = vld [vmem:[%s2 + $0x2f0] sm:$0xff]
    %v2480 = vld [vmem:[%s2 + $0x2f8] sm:$0xff]
    %v2481 = vld [vmem:[%s2 + $0x300] sm:$0xff]
    %v2482 = vld [vmem:[%s2 + $0x308] sm:$0xff]
    %v2483 = vld [vmem:[%s2 + $0x310] sm:$0xff]
    %v2484 = vld [vmem:[%s2 + $0x318] sm:$0xff]
    %v2485 = vld [vmem:[%s2 + $0x320] sm:$0xff]
    %v2486 = vld [vmem:[%s2 + $0x328] sm:$0xff]
    %v2487 = vld [vmem:[%s2 + $0x330] sm:$0xff]
    %v2488 = vld [vmem:[%s2 + $0x338] sm:$0xff]
    %v2489 = vld [vmem:[%s2 + $0x340] sm:$0xff]
    %v2490 = vld [vmem:[%s2 + $0x348] sm:$0xff]
    %v2491 = vld [vmem:[%s2 + $0x350] sm:$0xff]
    %v2492 = vld [vmem:[%s2 + $0x358] sm:$0xff]
    %v2493 = vld [vmem:[%s2 + $0x360] sm:$0xff]
    %v2494 = vld [vmem:[%s2 + $0x368] sm:$0xff]
    %v2495 = vld [vmem:[%s2 + $0x370] sm:$0xff]
    %v2496 = vld [vmem:[%s2 + $0x378] sm:$0xff]
    %v2497 = vld [vmem:[%s5 + $0x3] sm:$0x1]
    %v2498 = vlaneseq
    %v2499 = vshrl.u32 %v2498, 7
    %v2500 = vsub.s32 0, %v2499
    %v2501 = vrot.slane %v2497, %v2500
    %2502 = vmatprep.subr.mxu0 0.0
    %2503 = vmatpush1.msra.mxu0 %v2385
    %2504 = vmatprep.subr.mxu0 0.0
    %2505 = vmatpush1.msra.mxu0 %v2386
    %2506 = vmatprep.subr.mxu0 0.0
    %2507 = vmatpush1.msra.mxu0 %v2387
    %2508 = vmatprep.subr.mxu0 0.0
    %2509 = vmatpush1.msra.mxu0 %v2388
    %2510 = vmatprep.subr.mxu0 0.0
    %2511 = vmatpush1.msra.mxu0 %v2389
    %2512 = vmatprep.subr.mxu0 0.0
    %2513 = vmatpush1.msra.mxu0 %v2390
    %2514 = vmatprep.subr.mxu0 0.0
    %2515 = vmatpush1.msra.mxu0 %v2391
    %2516 = vmatprep.subr.mxu0 0.0
    %2517 = vmatpush1.msra.mxu0 %v2392
    %2518 = vmatprep.subr.mxu0 0.0
    %2519 = vmatpush1.msra.mxu0 %v2393
    %2520 = vmatprep.subr.mxu0 0.0
    %2521 = vmatpush1.msra.mxu0 %v2394
    %2522 = vmatprep.subr.mxu0 0.0
    %2523 = vmatpush1.msra.mxu0 %v2395
    %2524 = vmatprep.subr.mxu0 0.0
    %2525 = vmatpush1.msra.mxu0 %v2396
    %2526 = vmatprep.subr.mxu0 0.0
    %2527 = vmatpush1.msra.mxu0 %v2397
    %2528 = vmatprep.subr.mxu0 0.0
    %2529 = vmatpush1.msra.mxu0 %v2398
    %2530 = vmatprep.subr.mxu0 0.0
    %2531 = vmatpush1.msra.mxu0 %v2399
    %2532 = vmatprep.subr.mxu0 0.0
    %2533 = vmatpush1.msra.mxu0 %v2400
    %2534 = vmatprep.subr.mxu0 0.0
    %2535 = vmatpush1.msra.mxu0 %v2401
    %2536 = vmatprep.subr.mxu0 0.0
    %2537 = vmatpush1.msra.mxu0 %v2402
    %2538 = vmatprep.subr.mxu0 0.0
    %2539 = vmatpush1.msra.mxu0 %v2403
    %2540 = vmatprep.subr.mxu0 0.0
    %2541 = vmatpush1.msra.mxu0 %v2404
    %2542 = vmatprep.subr.mxu0 0.0
    %2543 = vmatpush1.msra.mxu0 %v2405
    %2544 = vmatprep.subr.mxu0 0.0
    %2545 = vmatpush1.msra.mxu0 %v2406
    %2546 = vmatprep.subr.mxu0 0.0
    %2547 = vmatpush1.msra.mxu0 %v2407
    %2548 = vmatprep.subr.mxu0 0.0
    %2549 = vmatpush1.msra.mxu0 %v2408
    %2550 = vmatprep.subr.mxu0 0.0
    %2551 = vmatpush1.msra.mxu0 %v2409
    %2552 = vmatprep.subr.mxu0 0.0
    %2553 = vmatpush1.msra.mxu0 %v2410
    %2554 = vmatprep.subr.mxu0 0.0
    %2555 = vmatpush1.msra.mxu0 %v2411
    %2556 = vmatprep.subr.mxu0 0.0
    %2557 = vmatpush1.msra.mxu0 %v2412
    %2558 = vmatprep.subr.mxu0 0.0
    %2559 = vmatpush1.msra.mxu0 %v2413
    %2560 = vmatprep.subr.mxu0 0.0
    %2561 = vmatpush1.msra.mxu0 %v2414
    %2562 = vmatprep.subr.mxu0 0.0
    %2563 = vmatpush1.msra.mxu0 %v2415
    %2564 = vmatprep.subr.mxu0 0.0
    %2565 = vmatpush1.msra.mxu0 %v2416
    %2566 = vmatprep.mubr.f32.mxu0 %v2379
    %2567 = vmatmul.mubr.f32.gmra.mrb[0].mxu0 %v2378
    %v2568 = vpop.f32.mrb[0].mxu0
    %v2569 = vadd.f32 %v2501, %v2568
    %v2570 = vpop.f32.mrb[0].mxu0
    %2571 = vdwg.mxu0
    %2572 = vmatprep.subr.mxu0 0.0
    %2573 = vmatpush1.msra.mxu0 %v2417
    %2574 = vmatprep.subr.mxu0 0.0
    %2575 = vmatpush1.msra.mxu0 %v2418
    %2576 = vmatprep.subr.mxu0 0.0
    %2577 = vmatpush1.msra.mxu0 %v2419
    %2578 = vmatprep.subr.mxu0 0.0
    %2579 = vmatpush1.msra.mxu0 %v2420
    %2580 = vmatprep.subr.mxu0 0.0
    %2581 = vmatpush1.msra.mxu0 %v2421
    %2582 = vmatprep.subr.mxu0 0.0
    %2583 = vmatpush1.msra.mxu0 %v2422
    %2584 = vmatprep.subr.mxu0 0.0
    %2585 = vmatpush1.msra.mxu0 %v2423
    %2586 = vmatprep.subr.mxu0 0.0
    %2587 = vmatpush1.msra.mxu0 %v2424
    %2588 = vmatprep.subr.mxu0 0.0
    %2589 = vmatpush1.msra.mxu0 %v2425
    %2590 = vmatprep.subr.mxu0 0.0
    %2591 = vmatpush1.msra.mxu0 %v2426
    %2592 = vmatprep.subr.mxu0 0.0
    %2593 = vmatpush1.msra.mxu0 %v2427
    %2594 = vmatprep.subr.mxu0 0.0
    %2595 = vmatpush1.msra.mxu0 %v2428
    %2596 = vmatprep.subr.mxu0 0.0
    %2597 = vmatpush1.msra.mxu0 %v2429
    %2598 = vmatprep.subr.mxu0 0.0
    %2599 = vmatpush1.msra.mxu0 %v2430
    %2600 = vmatprep.subr.mxu0 0.0
    %2601 = vmatpush1.msra.mxu0 %v2431
    %2602 = vmatprep.subr.mxu0 0.0
    %2603 = vmatpush1.msra.mxu0 %v2432
    %2604 = vmatprep.subr.mxu0 0.0
    %2605 = vmatpush1.msra.mxu0 %v2433
    %2606 = vmatprep.subr.mxu0 0.0
    %2607 = vmatpush1.msra.mxu0 %v2434
    %2608 = vmatprep.subr.mxu0 0.0
    %2609 = vmatpush1.msra.mxu0 %v2435
    %2610 = vmatprep.subr.mxu0 0.0
    %2611 = vmatpush1.msra.mxu0 %v2436
    %2612 = vmatprep.subr.mxu0 0.0
    %2613 = vmatpush1.msra.mxu0 %v2437
    %2614 = vmatprep.subr.mxu0 0.0
    %2615 = vmatpush1.msra.mxu0 %v2438
    %2616 = vmatprep.subr.mxu0 0.0
    %2617 = vmatpush1.msra.mxu0 %v2439
    %2618 = vmatprep.subr.mxu0 0.0
    %2619 = vmatpush1.msra.mxu0 %v2440
    %2620 = vmatprep.subr.mxu0 0.0
    %2621 = vmatpush1.msra.mxu0 %v2441
    %2622 = vmatprep.subr.mxu0 0.0
    %2623 = vmatpush1.msra.mxu0 %v2442
    %2624 = vmatprep.subr.mxu0 0.0
    %2625 = vmatpush1.msra.mxu0 %v2443
    %2626 = vmatprep.subr.mxu0 0.0
    %2627 = vmatpush1.msra.mxu0 %v2444
    %2628 = vmatprep.subr.mxu0 0.0
    %2629 = vmatpush1.msra.mxu0 %v2445
    %2630 = vmatprep.subr.mxu0 0.0
    %2631 = vmatpush1.msra.mxu0 %v2446
    %2632 = vmatprep.subr.mxu0 0.0
    %2633 = vmatpush1.msra.mxu0 %v2447
    %2634 = vmatprep.subr.mxu0 0.0
    %2635 = vmatpush1.msra.mxu0 %v2448
    %2636 = vmatprep.mubr.f32.mxu0 %v2381
    %2637 = vmatmul.mubr.f32.gmra.mrb[0].mxu0 %v2380
    %v2638 = vpop.f32.mrb[0].mxu0
    %v2639 = vadd.f32 %v2569, %v2638
    %v2640 = vpop.f32.mrb[0].mxu0
    %2641 = vdwg.mxu0
    %2642 = vmatprep.subr.mxu0 0.0
    %2643 = vmatpush1.msra.mxu0 %v2449
    %2644 = vmatprep.subr.mxu0 0.0
    %2645 = vmatpush1.msra.mxu0 %v2450
    %2646 = vmatprep.subr.mxu0 0.0
    %2647 = vmatpush1.msra.mxu0 %v2451
    %2648 = vmatprep.subr.mxu0 0.0
    %2649 = vmatpush1.msra.mxu0 %v2452
    %2650 = vmatprep.subr.mxu0 0.0
    %2651 = vmatpush1.msra.mxu0 %v2453
    %2652 = vmatprep.subr.mxu0 0.0
    %2653 = vmatpush1.msra.mxu0 %v2454
    %2654 = vmatprep.subr.mxu0 0.0
    %2655 = vmatpush1.msra.mxu0 %v2455
    %2656 = vmatprep.subr.mxu0 0.0
    %2657 = vmatpush1.msra.mxu0 %v2456
    %2658 = vmatprep.subr.mxu0 0.0
    %2659 = vmatpush1.msra.mxu0 %v2457
    %2660 = vmatprep.subr.mxu0 0.0
    %2661 = vmatpush1.msra.mxu0 %v2458
    %2662 = vmatprep.subr.mxu0 0.0
    %2663 = vmatpush1.msra.mxu0 %v2459
    %2664 = vmatprep.subr.mxu0 0.0
    %2665 = vmatpush1.msra.mxu0 %v2460
    %2666 = vmatprep.subr.mxu0 0.0
    %2667 = vmatpush1.msra.mxu0 %v2461
    %2668 = vmatprep.subr.mxu0 0.0
    %2669 = vmatpush1.msra.mxu0 %v2462
    %2670 = vmatprep.subr.mxu0 0.0
    %2671 = vmatpush1.msra.mxu0 %v2463
    %2672 = vmatprep.subr.mxu0 0.0
    %2673 = vmatpush1.msra.mxu0 %v2464
    %2674 = vmatprep.subr.mxu0 0.0
    %2675 = vmatpush1.msra.mxu0 %v2465
    %2676 = vmatprep.subr.mxu0 0.0
    %2677 = vmatpush1.msra.mxu0 %v2466
    %2678 = vmatprep.subr.mxu0 0.0
    %2679 = vmatpush1.msra.mxu0 %v2467
    %2680 = vmatprep.subr.mxu0 0.0
    %2681 = vmatpush1.msra.mxu0 %v2468
    %2682 = vmatprep.subr.mxu0 0.0
    %2683 = vmatpush1.msra.mxu0 %v2469
    %2684 = vmatprep.subr.mxu0 0.0
    %2685 = vmatpush1.msra.mxu0 %v2470
    %2686 = vmatprep.subr.mxu0 0.0
    %2687 = vmatpush1.msra.mxu0 %v2471
    %2688 = vmatprep.subr.mxu0 0.0
    %2689 = vmatpush1.msra.mxu0 %v2472
    %2690 = vmatprep.subr.mxu0 0.0
    %2691 = vmatpush1.msra.mxu0 %v2473
    %2692 = vmatprep.subr.mxu0 0.0
    %2693 = vmatpush1.msra.mxu0 %v2474
    %2694 = vmatprep.subr.mxu0 0.0
    %2695 = vmatpush1.msra.mxu0 %v2475
    %2696 = vmatprep.subr.mxu0 0.0
    %2697 = vmatpush1.msra.mxu0 %v2476
    %2698 = vmatprep.subr.mxu0 0.0
    %2699 = vmatpush1.msra.mxu0 %v2477
    %2700 = vmatprep.subr.mxu0 0.0
    %2701 = vmatpush1.msra.mxu0 %v2478
    %2702 = vmatprep.subr.mxu0 0.0
    %2703 = vmatpush1.msra.mxu0 %v2479
    %2704 = vmatprep.subr.mxu0 0.0
    %2705 = vmatpush1.msra.mxu0 %v2480
    %2706 = vmatprep.mubr.f32.mxu0 %v2383
    %2707 = vmatmul.mubr.f32.gmra.mrb[0].mxu0 %v2382
    %v2708 = vpop.f32.mrb[0].mxu0
    %v2709 = vadd.f32 %v2639, %v2708
    %v2710 = vpop.f32.mrb[0].mxu0
    %2711 = vdwg.mxu0
    %2712 = vmatprep.subr.mxu0 0.0
    %2713 = vmatpush1.msra.mxu0 %v2481
    %2714 = vmatprep.subr.mxu0 0.0
    %2715 = vmatpush1.msra.mxu0 %v2482
    %2716 = vmatprep.subr.mxu0 0.0
    %2717 = vmatpush1.msra.mxu0 %v2483
    %2718 = vmatprep.subr.mxu0 0.0
    %2719 = vmatpush1.msra.mxu0 %v2484
    %2720 = vmatprep.subr.mxu0 0.0
    %2721 = vmatpush1.msra.mxu0 %v2485
    %2722 = vmatprep.subr.mxu0 0.0
    %2723 = vmatpush1.msra.mxu0 %v2486
    %2724 = vmatprep.subr.mxu0 0.0
    %2725 = vmatpush1.msra.mxu0 %v2487
    %2726 = vmatprep.subr.mxu0 0.0
    %2727 = vmatpush1.msra.mxu0 %v2488
    %2728 = vmatprep.subr.mxu0 0.0
    %2729 = vmatpush1.msra.mxu0 %v2489
    %2730 = vmatprep.subr.mxu0 0.0
    %2731 = vmatpush1.msra.mxu0 %v2490
    %2732 = vmatprep.subr.mxu0 0.0
    %2733 = vmatpush1.msra.mxu0 %v2491
    %2734 = vmatprep.subr.mxu0 0.0
    %2735 = vmatpush1.msra.mxu0 %v2492
    %2736 = vmatprep.subr.mxu0 0.0
    %2737 = vmatpush1.msra.mxu0 %v2493
    %2738 = vmatprep.subr.mxu0 0.0
    %2739 = vmatpush1.msra.mxu0 %v2494
    %2740 = vmatprep.subr.mxu0 0.0
    %2741 = vmatpush1.msra.mxu0 %v2495
    %2742 = vmatprep.subr.mxu0 0.0
    %2743 = vmatpush1.msra.mxu0 %v2496
    %2744 = vmatprep.subr.mxu0 0.0
    %2745 = vmatpush1.msra.mxu0 0.0
    %2746 = vmatprep.subr.mxu0 0.0
    %2747 = vmatpush1.msra.mxu0 0.0
    %2748 = vmatprep.subr.mxu0 0.0
    %2749 = vmatpush1.msra.mxu0 0.0
    %2750 = vmatprep.subr.mxu0 0.0
    %2751 = vmatpush1.msra.mxu0 0.0
    %2752 = vmatprep.subr.mxu0 0.0
    %2753 = vmatpush1.msra.mxu0 0.0
    %2754 = vmatprep.subr.mxu0 0.0
    %2755 = vmatpush1.msra.mxu0 0.0
    %2756 = vmatprep.subr.mxu0 0.0
    %2757 = vmatpush1.msra.mxu0 0.0
    %2758 = vmatprep.subr.mxu0 0.0
    %2759 = vmatpush1.msra.mxu0 0.0
    %2760 = vmatprep.subr.mxu0 0.0
    %2761 = vmatpush1.msra.mxu0 0.0
    %2762 = vmatprep.subr.mxu0 0.0
    %2763 = vmatpush1.msra.mxu0 0.0
    %2764 = vmatprep.subr.mxu0 0.0
    %2765 = vmatpush1.msra.mxu0 0.0
    %2766 = vmatprep.subr.mxu0 0.0
    %2767 = vmatpush1.msra.mxu0 0.0
    %2768 = vmatprep.subr.mxu0 0.0
    %2769 = vmatpush1.msra.mxu0 0.0
    %2770 = vmatprep.subr.mxu0 0.0
    %2771 = vmatpush1.msra.mxu0 0.0
    %2772 = vmatprep.subr.mxu0 0.0
    %2773 = vmatpush1.msra.mxu0 0.0
    %2774 = vmatprep.subr.mxu0 0.0
    %2775 = vmatpush1.msra.mxu0 0.0
    %2776 = vmatprep.mubr.f32.mxu0 0.0
    %2777 = vmatmul.mubr.f32.gmra.mrb[0].mxu0 %v2384
    %v2778 = vpop.f32.mrb[0].mxu0
    %v2779 = vadd.f32 %v2709, %v2778
    %v2780 = vpop.f32.mrb[0].mxu0
    %2781 = vdwg.mxu0
    %v2782 = vmax.f32 %v2779, 0.0
    %v2783 = vld [vmem:[%s3] sm:$0xff]
    %v2784 = vld [vmem:[%s3 + $0x8] sm:$0xff]
    %v2785 = vld [vmem:[%s3 + $0x10] sm:$0xff]
    %v2786 = vld [vmem:[%s3 + $0x18] sm:$0xff]
    %v2787 = vld [vmem:[%s5 + $0x4] sm:$0x1]
    %v2788 = vlaneseq
    %v2789 = vshrl.u32 %v2788, 7
    %v2790 = vsub.s32 0, %v2789
    %v2791 = vrot.slane %v2787, %v2790
    %v2793 = vsel %vm238, %v2782, 0
    %2795 = vmatprep.subr.mxu0 0.0
    %2796 = vmatpush1.msra.mxu0 %v2783
    %2797 = vmatprep.subr.mxu0 0.0
    %2798 = vmatpush1.msra.mxu0 %v2784
    %2799 = vmatprep.subr.mxu0 0.0
    %2800 = vmatpush1.msra.mxu0 %v2785
    %2801 = vmatprep.subr.mxu0 0.0
    %2802 = vmatpush1.msra.mxu0 %v2786
    %2803 = vmatprep.subr.mxu0 0.0
    %2804 = vmatpush1.msra.mxu0 0.0
    %2805 = vmatprep.subr.mxu0 0.0
    %2806 = vmatpush1.msra.mxu0 0.0
    %2807 = vmatprep.subr.mxu0 0.0
    %2808 = vmatpush1.msra.mxu0 0.0
    %2809 = vmatprep.subr.mxu0 0.0
    %2810 = vmatpush1.msra.mxu0 0.0
    %2811 = vmatprep.subr.mxu0 0.0
    %2812 = vmatpush1.msra.mxu0 0.0
    %2813 = vmatprep.subr.mxu0 0.0
    %2814 = vmatpush1.msra.mxu0 0.0
    %2815 = vmatprep.subr.mxu0 0.0
    %2816 = vmatpush1.msra.mxu0 0.0
    %2817 = vmatprep.subr.mxu0 0.0
    %2818 = vmatpush1.msra.mxu0 0.0
    %2819 = vmatprep.subr.mxu0 0.0
    %2820 = vmatpush1.msra.mxu0 0.0
    %2821 = vmatprep.subr.mxu0 0.0
    %2822 = vmatpush1.msra.mxu0 0.0
    %2823 = vmatprep.subr.mxu0 0.0
    %2824 = vmatpush1.msra.mxu0 0.0
    %2825 = vmatprep.subr.mxu0 0.0
    %2826 = vmatpush1.msra.mxu0 0.0
    %2827 = vmatprep.subr.mxu0 0.0
    %2828 = vmatpush1.msra.mxu0 0.0
    %2829 = vmatprep.subr.mxu0 0.0
    %2830 = vmatpush1.msra.mxu0 0.0
    %2831 = vmatprep.subr.mxu0 0.0
    %2832 = vmatpush1.msra.mxu0 0.0
    %2833 = vmatprep.subr.mxu0 0.0
    %2834 = vmatpush1.msra.mxu0 0.0
    %2835 = vmatprep.subr.mxu0 0.0
    %2836 = vmatpush1.msra.mxu0 0.0
    %2837 = vmatprep.subr.mxu0 0.0
    %2838 = vmatpush1.msra.mxu0 0.0
    %2839 = vmatprep.subr.mxu0 0.0
    %2840 = vmatpush1.msra.mxu0 0.0
    %2841 = vmatprep.subr.mxu0 0.0
    %2842 = vmatpush1.msra.mxu0 0.0
    %2843 = vmatprep.subr.mxu0 0.0
    %2844 = vmatpush1.msra.mxu0 0.0
    %2845 = vmatprep.subr.mxu0 0.0
    %2846 = vmatpush1.msra.mxu0 0.0
    %2847 = vmatprep.subr.mxu0 0.0
    %2848 = vmatpush1.msra.mxu0 0.0
    %2849 = vmatprep.subr.mxu0 0.0
    %2850 = vmatpush1.msra.mxu0 0.0
    %2851 = vmatprep.subr.mxu0 0.0
    %2852 = vmatpush1.msra.mxu0 0.0
    %2853 = vmatprep.subr.mxu0 0.0
    %2854 = vmatpush1.msra.mxu0 0.0
    %2855 = vmatprep.subr.mxu0 0.0
    %2856 = vmatpush1.msra.mxu0 0.0
    %2857 = vmatprep.subr.mxu0 0.0
    %2858 = vmatpush1.msra.mxu0 0.0
    %2859 = vmatprep.mubr.f32.mxu0 0.0
    %2860 = vmatmul.mubr.f32.gmra.mrb[0].mxu0 %v2793
    %v2861 = vpop.f32.mrb[0].mxu0
    %v2862 = vadd.f32 %v2791, %v2861
    %v2863 = vpop.f32.mrb[0].mxu0
    %2864 = vdwg.mxu0
    %v2865 = vmax.f32 %v2862, 0.0
    %v2866 = vld [vmem:[%s4] sm:$0xff]
    %v2867 = vld [vmem:[%s4 + $0x8] sm:$0xff]
    %v2868 = vld [vmem:[%s4 + $0x10] sm:$0xff]
    %v2869 = vld [vmem:[%s4 + $0x18] sm:$0xff]
    %v2870 = vld [vmem:[%s5 + $0x5] sm:$0x1]
    %v2871 = vlaneseq
    %v2872 = vshrl.u32 %v2871, 7
    %v2873 = vsub.s32 0, %v2872
    %v2874 = vrot.slane %v2870, %v2873
    %v2876 = vsel %vm238, %v2865, 0
    %2878 = vmatprep.subr.mxu0 0.0
    %2879 = vmatpush1.msra.mxu0 %v2866
    %2880 = vmatprep.subr.mxu0 0.0
    %2881 = vmatpush1.msra.mxu0 %v2867
    %2882 = vmatprep.subr.mxu0 0.0
    %2883 = vmatpush1.msra.mxu0 %v2868
    %2884 = vmatprep.subr.mxu0 0.0
    %2885 = vmatpush1.msra.mxu0 %v2869
    %2886 = vmatprep.subr.mxu0 0.0
    %2887 = vmatpush1.msra.mxu0 0.0
    %2888 = vmatprep.subr.mxu0 0.0
    %2889 = vmatpush1.msra.mxu0 0.0
    %2890 = vmatprep.subr.mxu0 0.0
    %2891 = vmatpush1.msra.mxu0 0.0
    %2892 = vmatprep.subr.mxu0 0.0
    %2893 = vmatpush1.msra.mxu0 0.0
    %2894 = vmatprep.subr.mxu0 0.0
    %2895 = vmatpush1.msra.mxu0 0.0
    %2896 = vmatprep.subr.mxu0 0.0
    %2897 = vmatpush1.msra.mxu0 0.0
    %2898 = vmatprep.subr.mxu0 0.0
    %2899 = vmatpush1.msra.mxu0 0.0
    %2900 = vmatprep.subr.mxu0 0.0
    %2901 = vmatpush1.msra.mxu0 0.0
    %2902 = vmatprep.subr.mxu0 0.0
    %2903 = vmatpush1.msra.mxu0 0.0
    %2904 = vmatprep.subr.mxu0 0.0
    %2905 = vmatpush1.msra.mxu0 0.0
    %2906 = vmatprep.subr.mxu0 0.0
    %2907 = vmatpush1.msra.mxu0 0.0
    %2908 = vmatprep.subr.mxu0 0.0
    %2909 = vmatpush1.msra.mxu0 0.0
    %2910 = vmatprep.subr.mxu0 0.0
    %2911 = vmatpush1.msra.mxu0 0.0
    %2912 = vmatprep.subr.mxu0 0.0
    %2913 = vmatpush1.msra.mxu0 0.0
    %2914 = vmatprep.subr.mxu0 0.0
    %2915 = vmatpush1.msra.mxu0 0.0
    %2916 = vmatprep.subr.mxu0 0.0
    %2917 = vmatpush1.msra.mxu0 0.0
    %2918 = vmatprep.subr.mxu0 0.0
    %2919 = vmatpush1.msra.mxu0 0.0
    %2920 = vmatprep.subr.mxu0 0.0
    %2921 = vmatpush1.msra.mxu0 0.0
    %2922 = vmatprep.subr.mxu0 0.0
    %2923 = vmatpush1.msra.mxu0 0.0
    %2924 = vmatprep.subr.mxu0 0.0
    %2925 = vmatpush1.msra.mxu0 0.0
    %2926 = vmatprep.subr.mxu0 0.0
    %2927 = vmatpush1.msra.mxu0 0.0
    %2928 = vmatprep.subr.mxu0 0.0
    %2929 = vmatpush1.msra.mxu0 0.0
    %2930 = vmatprep.subr.mxu0 0.0
    %2931 = vmatpush1.msra.mxu0 0.0
    %2932 = vmatprep.subr.mxu0 0.0
    %2933 = vmatpush1.msra.mxu0 0.0
    %2934 = vmatprep.subr.mxu0 0.0
    %2935 = vmatpush1.msra.mxu0 0.0
    %2936 = vmatprep.subr.mxu0 0.0
    %2937 = vmatpush1.msra.mxu0 0.0
    %2938 = vmatprep.subr.mxu0 0.0
    %2939 = vmatpush1.msra.mxu0 0.0
    %2940 = vmatprep.subr.mxu0 0.0
    %2941 = vmatpush1.msra.mxu0 0.0
    %2942 = vmatprep.mubr.f32.mxu0 0.0
    %2943 = vmatmul.mubr.f32.gmra.mrb[0].mxu0 %v2876
    %v2944 = vpop.f32.mrb[0].mxu0
    %v2945 = vadd.f32 %v2874, %v2944
    %v2946 = vpop.f32.mrb[0].mxu0
    %2947 = vdwg.mxu0
    %vm2948 = vcmask 58368
    %2949 = vst.msk [vmem:[#allocation2] sm:$0x3] %vm2948, %v2945
    // Predicated region
    $region26: #{adaptation_forward.1} parent=1 // pred_check
      _
    $region27: #{adaptation_forward.1} parent=1 // pred_check_branch
      %2951 = sbr.rel (0) target = $region29
    $region28: #{adaptation_forward.1} parent=1 // pred_region
      %s2953 = ssub.s32 32, 32
      %2954 = vsyncadd [#allocation3], %s2953
      %s2956 = sshll.u32 [#allocation2], 4
      %s2957 = int_to_ptr.vmem [resolvable:$true] %s2956
      %2959 = dma.vmem_to_hbm [thread:$0]  %s2957, 32, %s6, [#allocation3]
    $region29: #{adaptation_forward.1} parent=1 // pred_fallthru
      _
    // Predicated region
    $region30: #{adaptation_forward.1} parent=1 // pred_check
      _
    $region31: #{adaptation_forward.1} parent=1 // pred_check_branch
      %2961 = sbr.rel (0) target = $region33
    $region32: #{adaptation_forward.1} parent=1 // pred_region
      %2962 = dma.done [#allocation3], 32
    $region33: #{adaptation_forward.1} parent=1 // pred_fallthru
      _
    %2963 = vsyncpa [#allocation3], 1

</llo_original>
